<compile_context>
chip_gen: v7x
topology: tpu7x:2x2x1
jax: 0.10.0
libtpu: 0.0.40
codegen_flags: <defaults>
</compile_context>

<pallas_src>
import functools

import jax
import jax.numpy as jnp
from jax import lax
from jax.experimental import pallas as pl
from jax.experimental.pallas import tpu as pltpu


# -----------------------------------------------------------------------------
# Fully fused kernel: layer-0 input projection (all timesteps, one MXU op) +
# stacked LSTM over time in loop-carry vregs + last-step FC + sigmoid.
# -----------------------------------------------------------------------------
def make_fused_kernel(no_layers, S, B_pad, H, V_pad):
    G = 4 * H

    def kernel(*refs):
        # ---- unpack refs (inputs, outputs, scratch) -------------------------
        idx = 0
        tok_ref = refs[idx]; idx += 1          # (S*B_pad, 1) int32, time-major
        w0_ref = refs[idx]; idx += 1           # (V_pad, 4H) bf16  = embedding @ W_ih_0
        b0_ref = refs[idx]; idx += 1           # (1, 4H)   f32     = b_ih_0 + b_hh_0
        whh_refs = [refs[idx]]; idx += 1       # layer 0: (H, 4H) bf16
        wih_refs = []
        b_refs = []
        for _ in range(1, no_layers):
            wih_refs.append(refs[idx]); idx += 1   # (H, 4H) bf16
            whh_refs.append(refs[idx]); idx += 1   # (H, 4H) bf16
            b_refs.append(refs[idx]); idx += 1     # (1, 4H) f32
        fcw_ref = refs[idx]; idx += 1          # (H, O) f32
        fcb_ref = refs[idx]; idx += 1          # (1, O) f32
        sig_ref = refs[idx]; idx += 1          # (B_pad, O)            out
        hN_ref = refs[idx]; idx += 1           # (L, B_pad, H)         out
        cN_ref = refs[idx]; idx += 1           # (L, B_pad, H)         out
        x0p_scr = refs[idx]; idx += 1          # (S, B_pad, 4H) f32    scratch

        # ---- layer-0 input projection for ALL timesteps: one MXU op ---------
        # One-hot row gather of the folded (embedding @ W_ih_0) table.  Note:
        # out-of-range token ids silently map to a zero row (PyTorch would
        # raise); padded batch rows use token 0 and are discarded by wrapper.
        tok = tok_ref[...]                                            # (S*B_pad, 1)
        onehot = (tok == lax.broadcasted_iota(jnp.int32, (S * B_pad, V_pad), 1)
                  ).astype(jnp.bfloat16)                              # (S*B_pad, V_pad)
        x0p = jnp.dot(onehot, w0_ref[...],
                      preferred_element_type=jnp.float32)             # (S*B_pad, 4H) f32
        x0p_scr[...] = x0p.reshape(S, B_pad, G) + b0_ref[...]         # bias pre-added

        # ---- hoist weight loads + bias broadcasts out of the unrolled loop --
        whh = [whh_refs[l][...] for l in range(no_layers)]            # bf16
        wih = [wih_refs[l][...] for l in range(no_layers - 1)]        # bf16
        bias = [jnp.broadcast_to(b_refs[l][...], (B_pad, G))
                for l in range(no_layers - 1)]                        # f32

        # ---- stacked LSTM recurrence; h/c live in the loop carry (vregs) ----
        zeros = jnp.zeros((B_pad, H), jnp.float32)                    # init_hidden
        carry0 = (tuple(zeros for _ in range(no_layers)),
                  tuple(zeros for _ in range(no_layers)))

        def step(t, carry):
            hs, cs = carry
            new_h, new_c = [], []
            x_bf = None
            for l in range(no_layers):
                h = hs[l]
                c = cs[l]
                h_bf = h.astype(jnp.bfloat16)                         # MXU LHS in bf16
                if l == 0:
                    gates = x0p_scr[t] + jnp.dot(
                        h_bf, whh[0], preferred_element_type=jnp.float32)
                else:
                    gates = (jnp.dot(x_bf, wih[l - 1],
                                     preferred_element_type=jnp.float32)
                             + jnp.dot(h_bf, whh[l],
                                       preferred_element_type=jnp.float32)
                             + bias[l - 1])                           # (B_pad, 4H) f32
                sg = jax.nn.sigmoid(gates)        # one full-vreg EUP pass
                tg = jnp.tanh(gates)              # one full-vreg EUP pass
                i_g = sg[:, 0 * H:1 * H]
                f_g = sg[:, 1 * H:2 * H]
                g_g = tg[:, 2 * H:3 * H]
                o_g = sg[:, 3 * H:4 * H]
                c_new = f_g * c + i_g * g_g                           # f32 elementwise
                h_new = o_g * jnp.tanh(c_new)
                new_h.append(h_new)
                new_c.append(c_new)
                x_bf = h_new.astype(jnp.bfloat16)
            return (tuple(new_h), tuple(new_c))

        hs_f, cs_f = lax.fori_loop(0, S, step, carry0, unroll=True)

        # ---- write final state once ------------------------------------------
        for l in range(no_layers):
            hN_ref[l] = hs_f[l]
            cN_ref[l] = cs_f[l]

        # ---- Dropout (identity in eval) -> FC -> Sigmoid on last timestep ----
        # TODO(synk): nn.Dropout training-mode Bernoulli masking not applied
        # (eval mode => identity), matching the reference forward in eval.
        logits = jnp.dot(hs_f[no_layers - 1], fcw_ref[...],
                         preferred_element_type=jnp.float32) + fcb_ref[...]
        sig_ref[...] = jax.nn.sigmoid(logits)

    return kernel


# -----------------------------------------------------------------------------
# Forward pass wrapper.
# -----------------------------------------------------------------------------
@functools.partial(jax.jit, static_argnames=("no_layers", "hidden_dim"))
def sentiment_rnn_forward(x_tokens, packed, *, no_layers, hidden_dim):
    B, S = x_tokens.shape
    H = hidden_dim
    V_pad = packed["w0"].shape[0]
    O = packed["fc_w"].shape[1]
    B_pad = max(8, ((B + 7) // 8) * 8)     # pad batch to f32 sublane minimum

    # Pad batch (token 0 for padded rows; results discarded) and make tokens
    # time-major flat.  This load is one-time, off the recurrence chain.
    tok = jnp.zeros((B_pad, S), jnp.int32).at[:B, :].set(x_tokens.astype(jnp.int32))
    tok_tm = tok.T.reshape(S * B_pad, 1)                                 # (S*B_pad, 1)

    inputs = [tok_tm, packed["w0"], packed["b0"], packed["whh_0"]]
    for l in range(1, no_layers):
        inputs += [packed[f"wih_{l}"], packed[f"whh_{l}"], packed[f"b_{l}"]]
    inputs += [packed["fc_w"], packed["fc_b"]]

    kernel = make_fused_kernel(no_layers, S, B_pad, H, V_pad)
    vmem = pl.BlockSpec(memory_space=pltpu.MemorySpace.VMEM)

    sig_pad, h_n_pad, c_n_pad = pl.pallas_call(
        kernel,
        out_shape=(
            jax.ShapeDtypeStruct((B_pad, O), jnp.float32),
            jax.ShapeDtypeStruct((no_layers, B_pad, H), jnp.float32),
            jax.ShapeDtypeStruct((no_layers, B_pad, H), jnp.float32),
        ),
        in_specs=[vmem] * len(inputs),
        out_specs=(vmem, vmem, vmem),
        scratch_shapes=[pltpu.VMEM((S, B_pad, 4 * H), jnp.float32)],
    )(*inputs)

    sig_out = sig_pad[:B, 0]                     # == sig.view(B, -1)[:, -1]
    hidden = (h_n_pad[:, :B, :], c_n_pad[:, :B, :])
    return sig_out, hidden


# -----------------------------------------------------------------------------
# Parameter init (PyTorch-equivalent layouts) + offline packing for the kernel.
# -----------------------------------------------------------------------------
def init_params(key, no_layers, vocab_size, output_dim, hidden_dim, embedding_dim):
    params = {}
    k = 1.0 / jnp.sqrt(jnp.float32(hidden_dim))
    keys = jax.random.split(key, 3 + 4 * no_layers)
    ki = iter(range(len(keys)))

    params["embedding"] = jax.random.normal(
        keys[next(ki)], (vocab_size, embedding_dim), dtype=jnp.float32)

    d_in = embedding_dim
    for l in range(no_layers):
        # PyTorch stores weight_ih_l{k}: (4H, D_in); keep transposed (D_in, 4H)
        # row-major layouts.  Gate order [i, f, g, o].
        params[f"w_ih_{l}"] = jax.random.uniform(
            keys[next(ki)], (d_in, 4 * hidden_dim), jnp.float32, -k, k)
        params[f"w_hh_{l}"] = jax.random.uniform(
            keys[next(ki)], (hidden_dim, 4 * hidden_dim), jnp.float32, -k, k)
        params[f"b_ih_{l}"] = jax.random.uniform(
            keys[next(ki)], (1, 4 * hidden_dim), jnp.float32, -k, k)
        params[f"b_hh_{l}"] = jax.random.uniform(
            keys[next(ki)], (1, 4 * hidden_dim), jnp.float32, -k, k)
        d_in = hidden_dim

    # fc: PyTorch weight (output_dim, hidden_dim); store transposed (H, O).
    params["fc_w"] = jax.random.uniform(
        keys[next(ki)], (hidden_dim, output_dim), jnp.float32, -k, k)
    params["fc_b"] = jax.random.uniform(
        keys[next(ki)], (1, output_dim), jnp.float32, -k, k)
    return params


def pack_params(params, no_layers):
    """Offline transforms: fold embedding into layer-0 input weights (padded to
    a lane-dense multiple of 128 rows) and cast MXU weight operands to bf16.
    Biases stay f32 (accumulation and elementwise math are f32 in-kernel)."""
    V, _ = params["embedding"].shape
    H = params["w_hh_0"].shape[0]
    V_pad = ((V + 127) // 128) * 128
    V_pad = max(V_pad, 128)
    w0 = params["embedding"] @ params["w_ih_0"]                      # (V, 4H) f32 fold
    w0_pad = jnp.zeros((V_pad, 4 * H), jnp.float32).at[:V, :].set(w0)

    packed = {
        "w0": w0_pad.astype(jnp.bfloat16),
        "b0": params["b_ih_0"] + params["b_hh_0"],
        "whh_0": params["w_hh_0"].astype(jnp.bfloat16),
        "fc_w": params["fc_w"],
        "fc_b": params["fc_b"],
    }
    for l in range(1, no_layers):
        packed[f"wih_{l}"] = params[f"w_ih_{l}"].astype(jnp.bfloat16)
        packed[f"whh_{l}"] = params[f"w_hh_{l}"].astype(jnp.bfloat16)
        packed[f"b_{l}"] = params[f"b_ih_{l}"] + params[f"b_hh_{l}"]
    return packed


if __name__ == "__main__":
    no_layers = 2
    vocab_size = 64
    output_dim = 1
    hidden_dim = 32
    embedding_dim = 32
    batch = 2
    seq = 8

    key = jax.random.PRNGKey(0)
    k_par, k_tok = jax.random.split(key)
    params = init_params(k_par, no_layers, vocab_size, output_dim,
                         hidden_dim, embedding_dim)
    packed = pack_params(params, no_layers)
    x_tokens = jax.random.randint(k_tok, (batch, seq), 0, vocab_size, dtype=jnp.int32)

    sig_out, (h_n, c_n) = sentiment_rnn_forward(
        x_tokens, packed, no_layers=no_layers, hidden_dim=hidden_dim)
    jax.block_until_ready((sig_out, h_n, c_n))

    assert sig_out.shape == (batch,)
    assert h_n.shape == (no_layers, batch, hidden_dim)
    assert c_n.shape == (no_layers, batch, hidden_dim)
    assert bool(jnp.all(jnp.isfinite(sig_out)))
    assert bool(jnp.all((sig_out >= 0.0) & (sig_out <= 1.0)))
    print("KERNEL_OK")
</pallas_src>

<mosaic_0001>
module attributes {stable_mosaic.version = 11 : i64} {
  func.func @kernel(%arg0: memref<64x1xi32, #tpu.memory_space<vmem>>, %arg1: memref<128x128xbf16, #tpu.memory_space<vmem>>, %arg2: memref<1x128xf32, #tpu.memory_space<vmem>>, %arg3: memref<32x128xbf16, #tpu.memory_space<vmem>>, %arg4: memref<32x128xbf16, #tpu.memory_space<vmem>>, %arg5: memref<32x128xbf16, #tpu.memory_space<vmem>>, %arg6: memref<1x128xf32, #tpu.memory_space<vmem>>, %arg7: memref<32x1xf32, #tpu.memory_space<vmem>>, %arg8: memref<1x1xf32, #tpu.memory_space<vmem>>, %arg9: memref<8x1xf32, #tpu.memory_space<vmem>>, %arg10: memref<2x8x32xf32, #tpu.memory_space<vmem>>, %arg11: memref<2x8x32xf32, #tpu.memory_space<vmem>>, %arg12: memref<8x8x128xf32, #tpu.memory_space<vmem>>) attributes {dimension_semantics = [], scalar_prefetch = 0 : i64, scratch_operands = 1 : i64, tpu.core_type = #tpu.core_type<tc>} {
    %c0 = arith.constant 0 : index
    %c0_0 = arith.constant 0 : index
    %0 = vector.load %arg0[%c0, %c0_0] : memref<64x1xi32, #tpu.memory_space<vmem>>, vector<64x1xi32>
    %1 = tpu.iota {dimensions = array<i32: 1>} : vector<64x128xi32>
    %2 = vector.broadcast %0 : vector<64x1xi32> to vector<64x128xi32>
    %3 = arith.cmpi eq, %2, %1 : vector<64x128xi32>
    %4 = arith.extui %3 : vector<64x128xi1> to vector<64x128xi32>
    %5 = arith.sitofp %4 : vector<64x128xi32> to vector<64x128xf32>
    %6 = arith.truncf %5 : vector<64x128xf32> to vector<64x128xbf16>
    %c0_1 = arith.constant 0 : index
    %c0_2 = arith.constant 0 : index
    %7 = vector.load %arg1[%c0_1, %c0_2] : memref<128x128xbf16, #tpu.memory_space<vmem>>, vector<128x128xbf16>
    %cst = arith.constant dense<0.000000e+00> : vector<64x128xf32>
    %8 = tpu.matmul %6, %7, %cst {dimension_numbers = #tpu.dot_dimension_numbers<[1], [0], [0], [1], [0, 0, 1, 1], [], []>} : vector<64x128xbf16>, vector<128x128xbf16>, vector<64x128xf32> -> vector<64x128xf32>
    %9 = vector.shape_cast %8 : vector<64x128xf32> to vector<8x8x128xf32>
    %c0_3 = arith.constant 0 : index
    %c0_4 = arith.constant 0 : index
    %10 = vector.load %arg2[%c0_3, %c0_4] : memref<1x128xf32, #tpu.memory_space<vmem>>, vector<1x128xf32>
    %11 = vector.shape_cast %10 : vector<1x128xf32> to vector<1x1x128xf32>
    %12 = vector.broadcast %11 : vector<1x1x128xf32> to vector<8x8x128xf32>
    %13 = arith.addf %9, %12 : vector<8x8x128xf32>
    %c0_5 = arith.constant 0 : index
    %c0_6 = arith.constant 0 : index
    %c0_7 = arith.constant 0 : index
    %14 = vector.load %arg12[%c0_5, %c0_6, %c0_7] : memref<8x8x128xf32, #tpu.memory_space<vmem>>, vector<8x8x128xf32>
    tpu.vector_store %arg12[%c0_5, %c0_6, %c0_7], %13 {strides = array<i32>} : memref<8x8x128xf32, #tpu.memory_space<vmem>>, vector<8x8x128xf32>,
    %c0_8 = arith.constant 0 : index
    %c0_9 = arith.constant 0 : index
    %15 = vector.load %arg3[%c0_8, %c0_9] : memref<32x128xbf16, #tpu.memory_space<vmem>>, vector<32x128xbf16>
    %c0_10 = arith.constant 0 : index
    %c0_11 = arith.constant 0 : index
    %16 = vector.load %arg5[%c0_10, %c0_11] : memref<32x128xbf16, #tpu.memory_space<vmem>>, vector<32x128xbf16>
    %c0_12 = arith.constant 0 : index
    %c0_13 = arith.constant 0 : index
    %17 = vector.load %arg4[%c0_12, %c0_13] : memref<32x128xbf16, #tpu.memory_space<vmem>>, vector<32x128xbf16>
    %c0_14 = arith.constant 0 : index
    %c0_15 = arith.constant 0 : index
    %18 = vector.load %arg6[%c0_14, %c0_15] : memref<1x128xf32, #tpu.memory_space<vmem>>, vector<1x128xf32>
    %19 = vector.shape_cast %18 : vector<1x128xf32> to vector<1x128xf32>
    %20 = vector.broadcast %19 : vector<1x128xf32> to vector<8x128xf32>
    %cst_16 = arith.constant 0.000000e+00 : f32
    %21 = vector.broadcast %cst_16 : f32 to vector<8x32xf32>
    %c0_i32 = arith.constant 0 : i32
    %22 = arith.truncf %21 : vector<8x32xf32> to vector<8x32xbf16>
    %23 = arith.index_cast %c0_i32 : i32 to index
    %c0_17 = arith.constant 0 : index
    %c0_18 = arith.constant 0 : index
    %24 = vector.load %arg12[%23, %c0_17, %c0_18] : memref<8x8x128xf32, #tpu.memory_space<vmem>>, vector<1x8x128xf32>
    %25 = vector.shape_cast %24 : vector<1x8x128xf32> to vector<8x128xf32>
    %cst_19 = arith.constant dense<0.000000e+00> : vector<8x128xf32>
    %26 = tpu.matmul %22, %15, %cst_19 {dimension_numbers = #tpu.dot_dimension_numbers<[1], [0], [0], [1], [0, 0, 1, 1], [], []>} : vector<8x32xbf16>, vector<32x128xbf16>, vector<8x128xf32> -> vector<8x128xf32>
    %27 = arith.addf %25, %26 : vector<8x128xf32>
    %28 = arith.negf %27 : vector<8x128xf32>
    %29 = math.exp %28 : vector<8x128xf32>
    %cst_20 = arith.constant 1.000000e+00 : f32
    %30 = vector.broadcast %cst_20 : f32 to vector<8x128xf32>
    %31 = arith.addf %30, %29 : vector<8x128xf32>
    %32 = arith.divf %30, %31 : vector<8x128xf32>
    %33 = math.tanh %27 : vector<8x128xf32>
    %34 = vector.extract_strided_slice %32 {offsets = [0, 0], sizes = [8, 32], strides = [1, 1]} : vector<8x128xf32> to vector<8x32xf32>
    %35 = vector.extract_strided_slice %32 {offsets = [0, 32], sizes = [8, 32], strides = [1, 1]} : vector<8x128xf32> to vector<8x32xf32>
    %36 = vector.extract_strided_slice %33 {offsets = [0, 64], sizes = [8, 32], strides = [1, 1]} : vector<8x128xf32> to vector<8x32xf32>
    %37 = vector.extract_strided_slice %32 {offsets = [0, 96], sizes = [8, 32], strides = [1, 1]} : vector<8x128xf32> to vector<8x32xf32>
    %38 = arith.mulf %35, %21 : vector<8x32xf32>
    %39 = arith.mulf %34, %36 : vector<8x32xf32>
    %40 = arith.addf %38, %39 : vector<8x32xf32>
    %41 = math.tanh %40 : vector<8x32xf32>
    %42 = arith.mulf %37, %41 : vector<8x32xf32>
    %43 = arith.truncf %42 : vector<8x32xf32> to vector<8x32xbf16>
    %44 = arith.truncf %21 : vector<8x32xf32> to vector<8x32xbf16>
    %cst_21 = arith.constant dense<0.000000e+00> : vector<8x128xf32>
    %45 = tpu.matmul %43, %17, %cst_21 {dimension_numbers = #tpu.dot_dimension_numbers<[1], [0], [0], [1], [0, 0, 1, 1], [], []>} : vector<8x32xbf16>, vector<32x128xbf16>, vector<8x128xf32> -> vector<8x128xf32>
    %cst_22 = arith.constant dense<0.000000e+00> : vector<8x128xf32>
    %46 = tpu.matmul %44, %16, %cst_22 {dimension_numbers = #tpu.dot_dimension_numbers<[1], [0], [0], [1], [0, 0, 1, 1], [], []>} : vector<8x32xbf16>, vector<32x128xbf16>, vector<8x128xf32> -> vector<8x128xf32>
    %47 = arith.addf %45, %46 : vector<8x128xf32>
    %48 = arith.addf %47, %20 : vector<8x128xf32>
    %49 = arith.negf %48 : vector<8x128xf32>
    %50 = math.exp %49 : vector<8x128xf32>
    %cst_23 = arith.constant 1.000000e+00 : f32
    %51 = vector.broadcast %cst_23 : f32 to vector<8x128xf32>
    %52 = arith.addf %51, %50 : vector<8x128xf32>
    %53 = arith.divf %51, %52 : vector<8x128xf32>
    %54 = math.tanh %48 : vector<8x128xf32>
    %55 = vector.extract_strided_slice %53 {offsets = [0, 0], sizes = [8, 32], strides = [1, 1]} : vector<8x128xf32> to vector<8x32xf32>
    %56 = vector.extract_strided_slice %53 {offsets = [0, 32], sizes = [8, 32], strides = [1, 1]} : vector<8x128xf32> to vector<8x32xf32>
    %57 = vector.extract_strided_slice %54 {offsets = [0, 64], sizes = [8, 32], strides = [1, 1]} : vector<8x128xf32> to vector<8x32xf32>
    %58 = vector.extract_strided_slice %53 {offsets = [0, 96], sizes = [8, 32], strides = [1, 1]} : vector<8x128xf32> to vector<8x32xf32>
    %59 = arith.mulf %56, %21 : vector<8x32xf32>
    %60 = arith.mulf %55, %57 : vector<8x32xf32>
    %61 = arith.addf %59, %60 : vector<8x32xf32>
    %62 = math.tanh %61 : vector<8x32xf32>
    %63 = arith.mulf %58, %62 : vector<8x32xf32>
    %c1_i32 = arith.constant 1 : i32
    %64 = arith.truncf %42 : vector<8x32xf32> to vector<8x32xbf16>
    %65 = arith.index_cast %c1_i32 : i32 to index
    %c0_24 = arith.constant 0 : index
    %c0_25 = arith.constant 0 : index
    %66 = vector.load %arg12[%65, %c0_24, %c0_25] : memref<8x8x128xf32, #tpu.memory_space<vmem>>, vector<1x8x128xf32>
    %67 = vector.shape_cast %66 : vector<1x8x128xf32> to vector<8x128xf32>
    %cst_26 = arith.constant dense<0.000000e+00> : vector<8x128xf32>
    %68 = tpu.matmul %64, %15, %cst_26 {dimension_numbers = #tpu.dot_dimension_numbers<[1], [0], [0], [1], [0, 0, 1, 1], [], []>} : vector<8x32xbf16>, vector<32x128xbf16>, vector<8x128xf32> -> vector<8x128xf32>
    %69 = arith.addf %67, %68 : vector<8x128xf32>
    %70 = arith.negf %69 : vector<8x128xf32>
    %71 = math.exp %70 : vector<8x128xf32>
    %cst_27 = arith.constant 1.000000e+00 : f32
    %72 = vector.broadcast %cst_27 : f32 to vector<8x128xf32>
    %73 = arith.addf %72, %71 : vector<8x128xf32>
    %74 = arith.divf %72, %73 : vector<8x128xf32>
    %75 = math.tanh %69 : vector<8x128xf32>
    %76 = vector.extract_strided_slice %74 {offsets = [0, 0], sizes = [8, 32], strides = [1, 1]} : vector<8x128xf32> to vector<8x32xf32>
    %77 = vector.extract_strided_slice %74 {offsets = [0, 32], sizes = [8, 32], strides = [1, 1]} : vector<8x128xf32> to vector<8x32xf32>
    %78 = vector.extract_strided_slice %75 {offsets = [0, 64], sizes = [8, 32], strides = [1, 1]} : vector<8x128xf32> to vector<8x32xf32>
    %79 = vector.extract_strided_slice %74 {offsets = [0, 96], sizes = [8, 32], strides = [1, 1]} : vector<8x128xf32> to vector<8x32xf32>
    %80 = arith.mulf %77, %40 : vector<8x32xf32>
    %81 = arith.mulf %76, %78 : vector<8x32xf32>
    %82 = arith.addf %80, %81 : vector<8x32xf32>
    %83 = math.tanh %82 : vector<8x32xf32>
    %84 = arith.mulf %79, %83 : vector<8x32xf32>
    %85 = arith.truncf %84 : vector<8x32xf32> to vector<8x32xbf16>
    %86 = arith.truncf %63 : vector<8x32xf32> to vector<8x32xbf16>
    %cst_28 = arith.constant dense<0.000000e+00> : vector<8x128xf32>
    %87 = tpu.matmul %85, %17, %cst_28 {dimension_numbers = #tpu.dot_dimension_numbers<[1], [0], [0], [1], [0, 0, 1, 1], [], []>} : vector<8x32xbf16>, vector<32x128xbf16>, vector<8x128xf32> -> vector<8x128xf32>
    %cst_29 = arith.constant dense<0.000000e+00> : vector<8x128xf32>
    %88 = tpu.matmul %86, %16, %cst_29 {dimension_numbers = #tpu.dot_dimension_numbers<[1], [0], [0], [1], [0, 0, 1, 1], [], []>} : vector<8x32xbf16>, vector<32x128xbf16>, vector<8x128xf32> -> vector<8x128xf32>
    %89 = arith.addf %87, %88 : vector<8x128xf32>
    %90 = arith.addf %89, %20 : vector<8x128xf32>
    %91 = arith.negf %90 : vector<8x128xf32>
    %92 = math.exp %91 : vector<8x128xf32>
    %cst_30 = arith.constant 1.000000e+00 : f32
    %93 = vector.broadcast %cst_30 : f32 to vector<8x128xf32>
    %94 = arith.addf %93, %92 : vector<8x128xf32>
    %95 = arith.divf %93, %94 : vector<8x128xf32>
    %96 = math.tanh %90 : vector<8x128xf32>
    %97 = vector.extract_strided_slice %95 {offsets = [0, 0], sizes = [8, 32], strides = [1, 1]} : vector<8x128xf32> to vector<8x32xf32>
    %98 = vector.extract_strided_slice %95 {offsets = [0, 32], sizes = [8, 32], strides = [1, 1]} : vector<8x128xf32> to vector<8x32xf32>
    %99 = vector.extract_strided_slice %96 {offsets = [0, 64], sizes = [8, 32], strides = [1, 1]} : vector<8x128xf32> to vector<8x32xf32>
    %100 = vector.extract_strided_slice %95 {offsets = [0, 96], sizes = [8, 32], strides = [1, 1]} : vector<8x128xf32> to vector<8x32xf32>
    %101 = arith.mulf %98, %61 : vector<8x32xf32>
    %102 = arith.mulf %97, %99 : vector<8x32xf32>
    %103 = arith.addf %101, %102 : vector<8x32xf32>
    %104 = math.tanh %103 : vector<8x32xf32>
    %105 = arith.mulf %100, %104 : vector<8x32xf32>
    %c2_i32 = arith.constant 2 : i32
    %106 = arith.truncf %84 : vector<8x32xf32> to vector<8x32xbf16>
    %107 = arith.index_cast %c2_i32 : i32 to index
    %c0_31 = arith.constant 0 : index
    %c0_32 = arith.constant 0 : index
    %108 = vector.load %arg12[%107, %c0_31, %c0_32] : memref<8x8x128xf32, #tpu.memory_space<vmem>>, vector<1x8x128xf32>
    %109 = vector.shape_cast %108 : vector<1x8x128xf32> to vector<8x128xf32>
    %cst_33 = arith.constant dense<0.000000e+00> : vector<8x128xf32>
    %110 = tpu.matmul %106, %15, %cst_33 {dimension_numbers = #tpu.dot_dimension_numbers<[1], [0], [0], [1], [0, 0, 1, 1], [], []>} : vector<8x32xbf16>, vector<32x128xbf16>, vector<8x128xf32> -> vector<8x128xf32>
    %111 = arith.addf %109, %110 : vector<8x128xf32>
    %112 = arith.negf %111 : vector<8x128xf32>
    %113 = math.exp %112 : vector<8x128xf32>
    %cst_34 = arith.constant 1.000000e+00 : f32
    %114 = vector.broadcast %cst_34 : f32 to vector<8x128xf32>
    %115 = arith.addf %114, %113 : vector<8x128xf32>
    %116 = arith.divf %114, %115 : vector<8x128xf32>
    %117 = math.tanh %111 : vector<8x128xf32>
    %118 = vector.extract_strided_slice %116 {offsets = [0, 0], sizes = [8, 32], strides = [1, 1]} : vector<8x128xf32> to vector<8x32xf32>
    %119 = vector.extract_strided_slice %116 {offsets = [0, 32], sizes = [8, 32], strides = [1, 1]} : vector<8x128xf32> to vector<8x32xf32>
    %120 = vector.extract_strided_slice %117 {offsets = [0, 64], sizes = [8, 32], strides = [1, 1]} : vector<8x128xf32> to vector<8x32xf32>
    %121 = vector.extract_strided_slice %116 {offsets = [0, 96], sizes = [8, 32], strides = [1, 1]} : vector<8x128xf32> to vector<8x32xf32>
    %122 = arith.mulf %119, %82 : vector<8x32xf32>
    %123 = arith.mulf %118, %120 : vector<8x32xf32>
    %124 = arith.addf %122, %123 : vector<8x32xf32>
    %125 = math.tanh %124 : vector<8x32xf32>
    %126 = arith.mulf %121, %125 : vector<8x32xf32>
    %127 = arith.truncf %126 : vector<8x32xf32> to vector<8x32xbf16>
    %128 = arith.truncf %105 : vector<8x32xf32> to vector<8x32xbf16>
    %cst_35 = arith.constant dense<0.000000e+00> : vector<8x128xf32>
    %129 = tpu.matmul %127, %17, %cst_35 {dimension_numbers = #tpu.dot_dimension_numbers<[1], [0], [0], [1], [0, 0, 1, 1], [], []>} : vector<8x32xbf16>, vector<32x128xbf16>, vector<8x128xf32> -> vector<8x128xf32>
    %cst_36 = arith.constant dense<0.000000e+00> : vector<8x128xf32>
    %130 = tpu.matmul %128, %16, %cst_36 {dimension_numbers = #tpu.dot_dimension_numbers<[1], [0], [0], [1], [0, 0, 1, 1], [], []>} : vector<8x32xbf16>, vector<32x128xbf16>, vector<8x128xf32> -> vector<8x128xf32>
    %131 = arith.addf %129, %130 : vector<8x128xf32>
    %132 = arith.addf %131, %20 : vector<8x128xf32>
    %133 = arith.negf %132 : vector<8x128xf32>
    %134 = math.exp %133 : vector<8x128xf32>
    %cst_37 = arith.constant 1.000000e+00 : f32
    %135 = vector.broadcast %cst_37 : f32 to vector<8x128xf32>
    %136 = arith.addf %135, %134 : vector<8x128xf32>
    %137 = arith.divf %135, %136 : vector<8x128xf32>
    %138 = math.tanh %132 : vector<8x128xf32>
    %139 = vector.extract_strided_slice %137 {offsets = [0, 0], sizes = [8, 32], strides = [1, 1]} : vector<8x128xf32> to vector<8x32xf32>
    %140 = vector.extract_strided_slice %137 {offsets = [0, 32], sizes = [8, 32], strides = [1, 1]} : vector<8x128xf32> to vector<8x32xf32>
    %141 = vector.extract_strided_slice %138 {offsets = [0, 64], sizes = [8, 32], strides = [1, 1]} : vector<8x128xf32> to vector<8x32xf32>
    %142 = vector.extract_strided_slice %137 {offsets = [0, 96], sizes = [8, 32], strides = [1, 1]} : vector<8x128xf32> to vector<8x32xf32>
    %143 = arith.mulf %140, %103 : vector<8x32xf32>
    %144 = arith.mulf %139, %141 : vector<8x32xf32>
    %145 = arith.addf %143, %144 : vector<8x32xf32>
    %146 = math.tanh %145 : vector<8x32xf32>
    %147 = arith.mulf %142, %146 : vector<8x32xf32>
    %c3_i32 = arith.constant 3 : i32
    %148 = arith.truncf %126 : vector<8x32xf32> to vector<8x32xbf16>
    %149 = arith.index_cast %c3_i32 : i32 to index
    %c0_38 = arith.constant 0 : index
    %c0_39 = arith.constant 0 : index
    %150 = vector.load %arg12[%149, %c0_38, %c0_39] : memref<8x8x128xf32, #tpu.memory_space<vmem>>, vector<1x8x128xf32>
    %151 = vector.shape_cast %150 : vector<1x8x128xf32> to vector<8x128xf32>
    %cst_40 = arith.constant dense<0.000000e+00> : vector<8x128xf32>
    %152 = tpu.matmul %148, %15, %cst_40 {dimension_numbers = #tpu.dot_dimension_numbers<[1], [0], [0], [1], [0, 0, 1, 1], [], []>} : vector<8x32xbf16>, vector<32x128xbf16>, vector<8x128xf32> -> vector<8x128xf32>
    %153 = arith.addf %151, %152 : vector<8x128xf32>
    %154 = arith.negf %153 : vector<8x128xf32>
    %155 = math.exp %154 : vector<8x128xf32>
    %cst_41 = arith.constant 1.000000e+00 : f32
    %156 = vector.broadcast %cst_41 : f32 to vector<8x128xf32>
    %157 = arith.addf %156, %155 : vector<8x128xf32>
    %158 = arith.divf %156, %157 : vector<8x128xf32>
    %159 = math.tanh %153 : vector<8x128xf32>
    %160 = vector.extract_strided_slice %158 {offsets = [0, 0], sizes = [8, 32], strides = [1, 1]} : vector<8x128xf32> to vector<8x32xf32>
    %161 = vector.extract_strided_slice %158 {offsets = [0, 32], sizes = [8, 32], strides = [1, 1]} : vector<8x128xf32> to vector<8x32xf32>
    %162 = vector.extract_strided_slice %159 {offsets = [0, 64], sizes = [8, 32], strides = [1, 1]} : vector<8x128xf32> to vector<8x32xf32>
    %163 = vector.extract_strided_slice %158 {offsets = [0, 96], sizes = [8, 32], strides = [1, 1]} : vector<8x128xf32> to vector<8x32xf32>
    %164 = arith.mulf %161, %124 : vector<8x32xf32>
    %165 = arith.mulf %160, %162 : vector<8x32xf32>
    %166 = arith.addf %164, %165 : vector<8x32xf32>
    %167 = math.tanh %166 : vector<8x32xf32>
    %168 = arith.mulf %163, %167 : vector<8x32xf32>
    %169 = arith.truncf %168 : vector<8x32xf32> to vector<8x32xbf16>
    %170 = arith.truncf %147 : vector<8x32xf32> to vector<8x32xbf16>
    %cst_42 = arith.constant dense<0.000000e+00> : vector<8x128xf32>
    %171 = tpu.matmul %169, %17, %cst_42 {dimension_numbers = #tpu.dot_dimension_numbers<[1], [0], [0], [1], [0, 0, 1, 1], [], []>} : vector<8x32xbf16>, vector<32x128xbf16>, vector<8x128xf32> -> vector<8x128xf32>
    %cst_43 = arith.constant dense<0.000000e+00> : vector<8x128xf32>
    %172 = tpu.matmul %170, %16, %cst_43 {dimension_numbers = #tpu.dot_dimension_numbers<[1], [0], [0], [1], [0, 0, 1, 1], [], []>} : vector<8x32xbf16>, vector<32x128xbf16>, vector<8x128xf32> -> vector<8x128xf32>
    %173 = arith.addf %171, %172 : vector<8x128xf32>
    %174 = arith.addf %173, %20 : vector<8x128xf32>
    %175 = arith.negf %174 : vector<8x128xf32>
    %176 = math.exp %175 : vector<8x128xf32>
    %cst_44 = arith.constant 1.000000e+00 : f32
    %177 = vector.broadcast %cst_44 : f32 to vector<8x128xf32>
    %178 = arith.addf %177, %176 : vector<8x128xf32>
    %179 = arith.divf %177, %178 : vector<8x128xf32>
    %180 = math.tanh %174 : vector<8x128xf32>
    %181 = vector.extract_strided_slice %179 {offsets = [0, 0], sizes = [8, 32], strides = [1, 1]} : vector<8x128xf32> to vector<8x32xf32>
    %182 = vector.extract_strided_slice %179 {offsets = [0, 32], sizes = [8, 32], strides = [1, 1]} : vector<8x128xf32> to vector<8x32xf32>
    %183 = vector.extract_strided_slice %180 {offsets = [0, 64], sizes = [8, 32], strides = [1, 1]} : vector<8x128xf32> to vector<8x32xf32>
    %184 = vector.extract_strided_slice %179 {offsets = [0, 96], sizes = [8, 32], strides = [1, 1]} : vector<8x128xf32> to vector<8x32xf32>
    %185 = arith.mulf %182, %145 : vector<8x32xf32>
    %186 = arith.mulf %181, %183 : vector<8x32xf32>
    %187 = arith.addf %185, %186 : vector<8x32xf32>
    %188 = math.tanh %187 : vector<8x32xf32>
    %189 = arith.mulf %184, %188 : vector<8x32xf32>
    %c4_i32 = arith.constant 4 : i32
    %190 = arith.truncf %168 : vector<8x32xf32> to vector<8x32xbf16>
    %191 = arith.index_cast %c4_i32 : i32 to index
    %c0_45 = arith.constant 0 : index
    %c0_46 = arith.constant 0 : index
    %192 = vector.load %arg12[%191, %c0_45, %c0_46] : memref<8x8x128xf32, #tpu.memory_space<vmem>>, vector<1x8x128xf32>
    %193 = vector.shape_cast %192 : vector<1x8x128xf32> to vector<8x128xf32>
    %cst_47 = arith.constant dense<0.000000e+00> : vector<8x128xf32>
    %194 = tpu.matmul %190, %15, %cst_47 {dimension_numbers = #tpu.dot_dimension_numbers<[1], [0], [0], [1], [0, 0, 1, 1], [], []>} : vector<8x32xbf16>, vector<32x128xbf16>, vector<8x128xf32> -> vector<8x128xf32>
    %195 = arith.addf %193, %194 : vector<8x128xf32>
    %196 = arith.negf %195 : vector<8x128xf32>
    %197 = math.exp %196 : vector<8x128xf32>
    %cst_48 = arith.constant 1.000000e+00 : f32
    %198 = vector.broadcast %cst_48 : f32 to vector<8x128xf32>
    %199 = arith.addf %198, %197 : vector<8x128xf32>
    %200 = arith.divf %198, %199 : vector<8x128xf32>
    %201 = math.tanh %195 : vector<8x128xf32>
    %202 = vector.extract_strided_slice %200 {offsets = [0, 0], sizes = [8, 32], strides = [1, 1]} : vector<8x128xf32> to vector<8x32xf32>
    %203 = vector.extract_strided_slice %200 {offsets = [0, 32], sizes = [8, 32], strides = [1, 1]} : vector<8x128xf32> to vector<8x32xf32>
    %204 = vector.extract_strided_slice %201 {offsets = [0, 64], sizes = [8, 32], strides = [1, 1]} : vector<8x128xf32> to vector<8x32xf32>
    %205 = vector.extract_strided_slice %200 {offsets = [0, 96], sizes = [8, 32], strides = [1, 1]} : vector<8x128xf32> to vector<8x32xf32>
    %206 = arith.mulf %203, %166 : vector<8x32xf32>
    %207 = arith.mulf %202, %204 : vector<8x32xf32>
    %208 = arith.addf %206, %207 : vector<8x32xf32>
    %209 = math.tanh %208 : vector<8x32xf32>
    %210 = arith.mulf %205, %209 : vector<8x32xf32>
    %211 = arith.truncf %210 : vector<8x32xf32> to vector<8x32xbf16>
    %212 = arith.truncf %189 : vector<8x32xf32> to vector<8x32xbf16>
    %cst_49 = arith.constant dense<0.000000e+00> : vector<8x128xf32>
    %213 = tpu.matmul %211, %17, %cst_49 {dimension_numbers = #tpu.dot_dimension_numbers<[1], [0], [0], [1], [0, 0, 1, 1], [], []>} : vector<8x32xbf16>, vector<32x128xbf16>, vector<8x128xf32> -> vector<8x128xf32>
    %cst_50 = arith.constant dense<0.000000e+00> : vector<8x128xf32>
    %214 = tpu.matmul %212, %16, %cst_50 {dimension_numbers = #tpu.dot_dimension_numbers<[1], [0], [0], [1], [0, 0, 1, 1], [], []>} : vector<8x32xbf16>, vector<32x128xbf16>, vector<8x128xf32> -> vector<8x128xf32>
    %215 = arith.addf %213, %214 : vector<8x128xf32>
    %216 = arith.addf %215, %20 : vector<8x128xf32>
    %217 = arith.negf %216 : vector<8x128xf32>
    %218 = math.exp %217 : vector<8x128xf32>
    %cst_51 = arith.constant 1.000000e+00 : f32
    %219 = vector.broadcast %cst_51 : f32 to vector<8x128xf32>
    %220 = arith.addf %219, %218 : vector<8x128xf32>
    %221 = arith.divf %219, %220 : vector<8x128xf32>
    %222 = math.tanh %216 : vector<8x128xf32>
    %223 = vector.extract_strided_slice %221 {offsets = [0, 0], sizes = [8, 32], strides = [1, 1]} : vector<8x128xf32> to vector<8x32xf32>
    %224 = vector.extract_strided_slice %221 {offsets = [0, 32], sizes = [8, 32], strides = [1, 1]} : vector<8x128xf32> to vector<8x32xf32>
    %225 = vector.extract_strided_slice %222 {offsets = [0, 64], sizes = [8, 32], strides = [1, 1]} : vector<8x128xf32> to vector<8x32xf32>
    %226 = vector.extract_strided_slice %221 {offsets = [0, 96], sizes = [8, 32], strides = [1, 1]} : vector<8x128xf32> to vector<8x32xf32>
    %227 = arith.mulf %224, %187 : vector<8x32xf32>
    %228 = arith.mulf %223, %225 : vector<8x32xf32>
    %229 = arith.addf %227, %228 : vector<8x32xf32>
    %230 = math.tanh %229 : vector<8x32xf32>
    %231 = arith.mulf %226, %230 : vector<8x32xf32>
    %c5_i32 = arith.constant 5 : i32
    %232 = arith.truncf %210 : vector<8x32xf32> to vector<8x32xbf16>
    %233 = arith.index_cast %c5_i32 : i32 to index
    %c0_52 = arith.constant 0 : index
    %c0_53 = arith.constant 0 : index
    %234 = vector.load %arg12[%233, %c0_52, %c0_53] : memref<8x8x128xf32, #tpu.memory_space<vmem>>, vector<1x8x128xf32>
    %235 = vector.shape_cast %234 : vector<1x8x128xf32> to vector<8x128xf32>
    %cst_54 = arith.constant dense<0.000000e+00> : vector<8x128xf32>
    %236 = tpu.matmul %232, %15, %cst_54 {dimension_numbers = #tpu.dot_dimension_numbers<[1], [0], [0], [1], [0, 0, 1, 1], [], []>} : vector<8x32xbf16>, vector<32x128xbf16>, vector<8x128xf32> -> vector<8x128xf32>
    %237 = arith.addf %235, %236 : vector<8x128xf32>
    %238 = arith.negf %237 : vector<8x128xf32>
    %239 = math.exp %238 : vector<8x128xf32>
    %cst_55 = arith.constant 1.000000e+00 : f32
    %240 = vector.broadcast %cst_55 : f32 to vector<8x128xf32>
    %241 = arith.addf %240, %239 : vector<8x128xf32>
    %242 = arith.divf %240, %241 : vector<8x128xf32>
    %243 = math.tanh %237 : vector<8x128xf32>
    %244 = vector.extract_strided_slice %242 {offsets = [0, 0], sizes = [8, 32], strides = [1, 1]} : vector<8x128xf32> to vector<8x32xf32>
    %245 = vector.extract_strided_slice %242 {offsets = [0, 32], sizes = [8, 32], strides = [1, 1]} : vector<8x128xf32> to vector<8x32xf32>
    %246 = vector.extract_strided_slice %243 {offsets = [0, 64], sizes = [8, 32], strides = [1, 1]} : vector<8x128xf32> to vector<8x32xf32>
    %247 = vector.extract_strided_slice %242 {offsets = [0, 96], sizes = [8, 32], strides = [1, 1]} : vector<8x128xf32> to vector<8x32xf32>
    %248 = arith.mulf %245, %208 : vector<8x32xf32>
    %249 = arith.mulf %244, %246 : vector<8x32xf32>
    %250 = arith.addf %248, %249 : vector<8x32xf32>
    %251 = math.tanh %250 : vector<8x32xf32>
    %252 = arith.mulf %247, %251 : vector<8x32xf32>
    %253 = arith.truncf %252 : vector<8x32xf32> to vector<8x32xbf16>
    %254 = arith.truncf %231 : vector<8x32xf32> to vector<8x32xbf16>
    %cst_56 = arith.constant dense<0.000000e+00> : vector<8x128xf32>
    %255 = tpu.matmul %253, %17, %cst_56 {dimension_numbers = #tpu.dot_dimension_numbers<[1], [0], [0], [1], [0, 0, 1, 1], [], []>} : vector<8x32xbf16>, vector<32x128xbf16>, vector<8x128xf32> -> vector<8x128xf32>
    %cst_57 = arith.constant dense<0.000000e+00> : vector<8x128xf32>
    %256 = tpu.matmul %254, %16, %cst_57 {dimension_numbers = #tpu.dot_dimension_numbers<[1], [0], [0], [1], [0, 0, 1, 1], [], []>} : vector<8x32xbf16>, vector<32x128xbf16>, vector<8x128xf32> -> vector<8x128xf32>
    %257 = arith.addf %255, %256 : vector<8x128xf32>
    %258 = arith.addf %257, %20 : vector<8x128xf32>
    %259 = arith.negf %258 : vector<8x128xf32>
    %260 = math.exp %259 : vector<8x128xf32>
    %cst_58 = arith.constant 1.000000e+00 : f32
    %261 = vector.broadcast %cst_58 : f32 to vector<8x128xf32>
    %262 = arith.addf %261, %260 : vector<8x128xf32>
    %263 = arith.divf %261, %262 : vector<8x128xf32>
    %264 = math.tanh %258 : vector<8x128xf32>
    %265 = vector.extract_strided_slice %263 {offsets = [0, 0], sizes = [8, 32], strides = [1, 1]} : vector<8x128xf32> to vector<8x32xf32>
    %266 = vector.extract_strided_slice %263 {offsets = [0, 32], sizes = [8, 32], strides = [1, 1]} : vector<8x128xf32> to vector<8x32xf32>
    %267 = vector.extract_strided_slice %264 {offsets = [0, 64], sizes = [8, 32], strides = [1, 1]} : vector<8x128xf32> to vector<8x32xf32>
    %268 = vector.extract_strided_slice %263 {offsets = [0, 96], sizes = [8, 32], strides = [1, 1]} : vector<8x128xf32> to vector<8x32xf32>
    %269 = arith.mulf %266, %229 : vector<8x32xf32>
    %270 = arith.mulf %265, %267 : vector<8x32xf32>
    %271 = arith.addf %269, %270 : vector<8x32xf32>
    %272 = math.tanh %271 : vector<8x32xf32>
    %273 = arith.mulf %268, %272 : vector<8x32xf32>
    %c6_i32 = arith.constant 6 : i32
    %274 = arith.truncf %252 : vector<8x32xf32> to vector<8x32xbf16>
    %275 = arith.index_cast %c6_i32 : i32 to index
    %c0_59 = arith.constant 0 : index
    %c0_60 = arith.constant 0 : index
    %276 = vector.load %arg12[%275, %c0_59, %c0_60] : memref<8x8x128xf32, #tpu.memory_space<vmem>>, vector<1x8x128xf32>
    %277 = vector.shape_cast %276 : vector<1x8x128xf32> to vector<8x128xf32>
    %cst_61 = arith.constant dense<0.000000e+00> : vector<8x128xf32>
    %278 = tpu.matmul %274, %15, %cst_61 {dimension_numbers = #tpu.dot_dimension_numbers<[1], [0], [0], [1], [0, 0, 1, 1], [], []>} : vector<8x32xbf16>, vector<32x128xbf16>, vector<8x128xf32> -> vector<8x128xf32>
    %279 = arith.addf %277, %278 : vector<8x128xf32>
    %280 = arith.negf %279 : vector<8x128xf32>
    %281 = math.exp %280 : vector<8x128xf32>
    %cst_62 = arith.constant 1.000000e+00 : f32
    %282 = vector.broadcast %cst_62 : f32 to vector<8x128xf32>
    %283 = arith.addf %282, %281 : vector<8x128xf32>
    %284 = arith.divf %282, %283 : vector<8x128xf32>
    %285 = math.tanh %279 : vector<8x128xf32>
    %286 = vector.extract_strided_slice %284 {offsets = [0, 0], sizes = [8, 32], strides = [1, 1]} : vector<8x128xf32> to vector<8x32xf32>
    %287 = vector.extract_strided_slice %284 {offsets = [0, 32], sizes = [8, 32], strides = [1, 1]} : vector<8x128xf32> to vector<8x32xf32>
    %288 = vector.extract_strided_slice %285 {offsets = [0, 64], sizes = [8, 32], strides = [1, 1]} : vector<8x128xf32> to vector<8x32xf32>
    %289 = vector.extract_strided_slice %284 {offsets = [0, 96], sizes = [8, 32], strides = [1, 1]} : vector<8x128xf32> to vector<8x32xf32>
    %290 = arith.mulf %287, %250 : vector<8x32xf32>
    %291 = arith.mulf %286, %288 : vector<8x32xf32>
    %292 = arith.addf %290, %291 : vector<8x32xf32>
    %293 = math.tanh %292 : vector<8x32xf32>
    %294 = arith.mulf %289, %293 : vector<8x32xf32>
    %295 = arith.truncf %294 : vector<8x32xf32> to vector<8x32xbf16>
    %296 = arith.truncf %273 : vector<8x32xf32> to vector<8x32xbf16>
    %cst_63 = arith.constant dense<0.000000e+00> : vector<8x128xf32>
    %297 = tpu.matmul %295, %17, %cst_63 {dimension_numbers = #tpu.dot_dimension_numbers<[1], [0], [0], [1], [0, 0, 1, 1], [], []>} : vector<8x32xbf16>, vector<32x128xbf16>, vector<8x128xf32> -> vector<8x128xf32>
    %cst_64 = arith.constant dense<0.000000e+00> : vector<8x128xf32>
    %298 = tpu.matmul %296, %16, %cst_64 {dimension_numbers = #tpu.dot_dimension_numbers<[1], [0], [0], [1], [0, 0, 1, 1], [], []>} : vector<8x32xbf16>, vector<32x128xbf16>, vector<8x128xf32> -> vector<8x128xf32>
    %299 = arith.addf %297, %298 : vector<8x128xf32>
    %300 = arith.addf %299, %20 : vector<8x128xf32>
    %301 = arith.negf %300 : vector<8x128xf32>
    %302 = math.exp %301 : vector<8x128xf32>
    %cst_65 = arith.constant 1.000000e+00 : f32
    %303 = vector.broadcast %cst_65 : f32 to vector<8x128xf32>
    %304 = arith.addf %303, %302 : vector<8x128xf32>
    %305 = arith.divf %303, %304 : vector<8x128xf32>
    %306 = math.tanh %300 : vector<8x128xf32>
    %307 = vector.extract_strided_slice %305 {offsets = [0, 0], sizes = [8, 32], strides = [1, 1]} : vector<8x128xf32> to vector<8x32xf32>
    %308 = vector.extract_strided_slice %305 {offsets = [0, 32], sizes = [8, 32], strides = [1, 1]} : vector<8x128xf32> to vector<8x32xf32>
    %309 = vector.extract_strided_slice %306 {offsets = [0, 64], sizes = [8, 32], strides = [1, 1]} : vector<8x128xf32> to vector<8x32xf32>
    %310 = vector.extract_strided_slice %305 {offsets = [0, 96], sizes = [8, 32], strides = [1, 1]} : vector<8x128xf32> to vector<8x32xf32>
    %311 = arith.mulf %308, %271 : vector<8x32xf32>
    %312 = arith.mulf %307, %309 : vector<8x32xf32>
    %313 = arith.addf %311, %312 : vector<8x32xf32>
    %314 = math.tanh %313 : vector<8x32xf32>
    %315 = arith.mulf %310, %314 : vector<8x32xf32>
    %c7_i32 = arith.constant 7 : i32
    %316 = arith.truncf %294 : vector<8x32xf32> to vector<8x32xbf16>
    %317 = arith.index_cast %c7_i32 : i32 to index
    %c0_66 = arith.constant 0 : index
    %c0_67 = arith.constant 0 : index
    %318 = vector.load %arg12[%317, %c0_66, %c0_67] : memref<8x8x128xf32, #tpu.memory_space<vmem>>, vector<1x8x128xf32>
    %319 = vector.shape_cast %318 : vector<1x8x128xf32> to vector<8x128xf32>
    %cst_68 = arith.constant dense<0.000000e+00> : vector<8x128xf32>
    %320 = tpu.matmul %316, %15, %cst_68 {dimension_numbers = #tpu.dot_dimension_numbers<[1], [0], [0], [1], [0, 0, 1, 1], [], []>} : vector<8x32xbf16>, vector<32x128xbf16>, vector<8x128xf32> -> vector<8x128xf32>
    %321 = arith.addf %319, %320 : vector<8x128xf32>
    %322 = arith.negf %321 : vector<8x128xf32>
    %323 = math.exp %322 : vector<8x128xf32>
    %cst_69 = arith.constant 1.000000e+00 : f32
    %324 = vector.broadcast %cst_69 : f32 to vector<8x128xf32>
    %325 = arith.addf %324, %323 : vector<8x128xf32>
    %326 = arith.divf %324, %325 : vector<8x128xf32>
    %327 = math.tanh %321 : vector<8x128xf32>
    %328 = vector.extract_strided_slice %326 {offsets = [0, 0], sizes = [8, 32], strides = [1, 1]} : vector<8x128xf32> to vector<8x32xf32>
    %329 = vector.extract_strided_slice %326 {offsets = [0, 32], sizes = [8, 32], strides = [1, 1]} : vector<8x128xf32> to vector<8x32xf32>
    %330 = vector.extract_strided_slice %327 {offsets = [0, 64], sizes = [8, 32], strides = [1, 1]} : vector<8x128xf32> to vector<8x32xf32>
    %331 = vector.extract_strided_slice %326 {offsets = [0, 96], sizes = [8, 32], strides = [1, 1]} : vector<8x128xf32> to vector<8x32xf32>
    %332 = arith.mulf %329, %292 : vector<8x32xf32>
    %333 = arith.mulf %328, %330 : vector<8x32xf32>
    %334 = arith.addf %332, %333 : vector<8x32xf32>
    %335 = math.tanh %334 : vector<8x32xf32>
    %336 = arith.mulf %331, %335 : vector<8x32xf32>
    %337 = arith.truncf %336 : vector<8x32xf32> to vector<8x32xbf16>
    %338 = arith.truncf %315 : vector<8x32xf32> to vector<8x32xbf16>
    %cst_70 = arith.constant dense<0.000000e+00> : vector<8x128xf32>
    %339 = tpu.matmul %337, %17, %cst_70 {dimension_numbers = #tpu.dot_dimension_numbers<[1], [0], [0], [1], [0, 0, 1, 1], [], []>} : vector<8x32xbf16>, vector<32x128xbf16>, vector<8x128xf32> -> vector<8x128xf32>
    %cst_71 = arith.constant dense<0.000000e+00> : vector<8x128xf32>
    %340 = tpu.matmul %338, %16, %cst_71 {dimension_numbers = #tpu.dot_dimension_numbers<[1], [0], [0], [1], [0, 0, 1, 1], [], []>} : vector<8x32xbf16>, vector<32x128xbf16>, vector<8x128xf32> -> vector<8x128xf32>
    %341 = arith.addf %339, %340 : vector<8x128xf32>
    %342 = arith.addf %341, %20 : vector<8x128xf32>
    %343 = arith.negf %342 : vector<8x128xf32>
    %344 = math.exp %343 : vector<8x128xf32>
    %cst_72 = arith.constant 1.000000e+00 : f32
    %345 = vector.broadcast %cst_72 : f32 to vector<8x128xf32>
    %346 = arith.addf %345, %344 : vector<8x128xf32>
    %347 = arith.divf %345, %346 : vector<8x128xf32>
    %348 = math.tanh %342 : vector<8x128xf32>
    %349 = vector.extract_strided_slice %347 {offsets = [0, 0], sizes = [8, 32], strides = [1, 1]} : vector<8x128xf32> to vector<8x32xf32>
    %350 = vector.extract_strided_slice %347 {offsets = [0, 32], sizes = [8, 32], strides = [1, 1]} : vector<8x128xf32> to vector<8x32xf32>
    %351 = vector.extract_strided_slice %348 {offsets = [0, 64], sizes = [8, 32], strides = [1, 1]} : vector<8x128xf32> to vector<8x32xf32>
    %352 = vector.extract_strided_slice %347 {offsets = [0, 96], sizes = [8, 32], strides = [1, 1]} : vector<8x128xf32> to vector<8x32xf32>
    %353 = arith.mulf %350, %313 : vector<8x32xf32>
    %354 = arith.mulf %349, %351 : vector<8x32xf32>
    %355 = arith.addf %353, %354 : vector<8x32xf32>
    %356 = math.tanh %355 : vector<8x32xf32>
    %357 = arith.mulf %352, %356 : vector<8x32xf32>
    %c8_i32 = arith.constant 8 : i32
    %c0_73 = arith.constant 0 : index
    %c0_74 = arith.constant 0 : index
    %c0_75 = arith.constant 0 : index
    %358 = vector.load %arg10[%c0_73, %c0_74, %c0_75] : memref<2x8x32xf32, #tpu.memory_space<vmem>>, vector<1x8x32xf32>
    %359 = vector.shape_cast %358 : vector<1x8x32xf32> to vector<8x32xf32>
    %360 = vector.shape_cast %336 : vector<8x32xf32> to vector<1x8x32xf32>
    tpu.vector_store %arg10[%c0_73, %c0_74, %c0_75], %360 {strides = array<i32>} : memref<2x8x32xf32, #tpu.memory_space<vmem>>, vector<1x8x32xf32>,
    %c0_76 = arith.constant 0 : index
    %c0_77 = arith.constant 0 : index
    %c0_78 = arith.constant 0 : index
    %361 = vector.load %arg11[%c0_76, %c0_77, %c0_78] : memref<2x8x32xf32, #tpu.memory_space<vmem>>, vector<1x8x32xf32>
    %362 = vector.shape_cast %361 : vector<1x8x32xf32> to vector<8x32xf32>
    %363 = vector.shape_cast %334 : vector<8x32xf32> to vector<1x8x32xf32>
    tpu.vector_store %arg11[%c0_76, %c0_77, %c0_78], %363 {strides = array<i32>} : memref<2x8x32xf32, #tpu.memory_space<vmem>>, vector<1x8x32xf32>,
    %c1 = arith.constant 1 : index
    %c0_79 = arith.constant 0 : index
    %c0_80 = arith.constant 0 : index
    %364 = vector.load %arg10[%c1, %c0_79, %c0_80] : memref<2x8x32xf32, #tpu.memory_space<vmem>>, vector<1x8x32xf32>
    %365 = vector.shape_cast %364 : vector<1x8x32xf32> to vector<8x32xf32>
    %366 = vector.shape_cast %357 : vector<8x32xf32> to vector<1x8x32xf32>
    tpu.vector_store %arg10[%c1, %c0_79, %c0_80], %366 {strides = array<i32>} : memref<2x8x32xf32, #tpu.memory_space<vmem>>, vector<1x8x32xf32>,
    %c1_81 = arith.constant 1 : index
    %c0_82 = arith.constant 0 : index
    %c0_83 = arith.constant 0 : index
    %367 = vector.load %arg11[%c1_81, %c0_82, %c0_83] : memref<2x8x32xf32, #tpu.memory_space<vmem>>, vector<1x8x32xf32>
    %368 = vector.shape_cast %367 : vector<1x8x32xf32> to vector<8x32xf32>
    %369 = vector.shape_cast %355 : vector<8x32xf32> to vector<1x8x32xf32>
    tpu.vector_store %arg11[%c1_81, %c0_82, %c0_83], %369 {strides = array<i32>} : memref<2x8x32xf32, #tpu.memory_space<vmem>>, vector<1x8x32xf32>,
    %c0_84 = arith.constant 0 : index
    %c0_85 = arith.constant 0 : index
    %370 = vector.load %arg7[%c0_84, %c0_85] : memref<32x1xf32, #tpu.memory_space<vmem>>, vector<32x1xf32>
    %cst_86 = arith.constant dense<0.000000e+00> : vector<8x1xf32>
    %371 = tpu.matmul %357, %370, %cst_86 {dimension_numbers = #tpu.dot_dimension_numbers<[1], [0], [0], [1], [0, 0, 1, 1], [], []>} : vector<8x32xf32>, vector<32x1xf32>, vector<8x1xf32> -> vector<8x1xf32>
    %c0_87 = arith.constant 0 : index
    %c0_88 = arith.constant 0 : index
    %372 = vector.load %arg8[%c0_87, %c0_88] : memref<1x1xf32, #tpu.memory_space<vmem>>, vector<1x1xf32>
    %373 = vector.broadcast %372 : vector<1x1xf32> to vector<8x1xf32>
    %374 = arith.addf %371, %373 : vector<8x1xf32>
    %375 = arith.negf %374 : vector<8x1xf32>
    %376 = math.exp %375 : vector<8x1xf32>
    %cst_89 = arith.constant 1.000000e+00 : f32
    %377 = vector.broadcast %cst_89 : f32 to vector<8x1xf32>
    %378 = arith.addf %377, %376 : vector<8x1xf32>
    %379 = arith.divf %377, %378 : vector<8x1xf32>
    %c0_90 = arith.constant 0 : index
    %c0_91 = arith.constant 0 : index
    %380 = vector.load %arg9[%c0_90, %c0_91] : memref<8x1xf32, #tpu.memory_space<vmem>>, vector<8x1xf32>
    tpu.vector_store %arg9[%c0_90, %c0_91], %379 {strides = array<i32>} : memref<8x1xf32, #tpu.memory_space<vmem>>, vector<8x1xf32>,
    return
  }
}

</mosaic_0001>

<llo_original>
// kernel: sentiment_rnn_forward.1
$region0: #{sentiment_rnn_forward.1}
  #allocation0 [shape = 'u32[]', space=smem, size = 0x4, offset = 0x4, fixed_abs, tag = 'smem constant byte address 0x4 - core index']
  #allocation1 [shape = 'u32[144,128]{1,0:T(1,128)}', space=vmem, size = 0x12000, scoped, tag = 'internal scratch']
  #allocation2 [shape = 'f32[8,8,128]{2,1,0:T(8,128)}', space=vmem, size = 0x8000, scoped, tag = 'scratch operand']
  #allocation3 [shape = 'f32[1,1]{1,0:T(1,128)S(1)}', space=vmem, size = 0x200, scoped, tag = 'scoped memory for sentiment_rnn_forward.1']
  %s0 = inlined_call_operand.vmem [shape: s32[64,1], index: 0, kind: input, shape index: {}]
  %s1 = inlined_call_operand.vmem [shape: bf16[128,128], index: 1, kind: input, shape index: {}]
  %s2 = inlined_call_operand.vmem [shape: f32[1,128], index: 2, kind: input, shape index: {}]
  %s3 = inlined_call_operand.vmem [shape: bf16[32,128], index: 3, kind: input, shape index: {}]
  %s4 = inlined_call_operand.vmem [shape: bf16[32,128], index: 4, kind: input, shape index: {}]
  %s5 = inlined_call_operand.vmem [shape: bf16[32,128], index: 5, kind: input, shape index: {}]
  %s6 = inlined_call_operand.vmem [shape: f32[1,128], index: 6, kind: input, shape index: {}]
  %s7 = inlined_call_operand.vmem [shape: f32[32,1], index: 7, kind: input, shape index: {}]
  %s8 = inlined_call_operand.<no memory space> [shape: f32[1,1], index: 8, kind: input, shape index: {}]
  %s9 = inlined_call_operand.vmem [shape: f32[8,1], index: 9, kind: output, shape index: {0}]
  %s10 = inlined_call_operand.vmem [shape: f32[2,8,32], index: 10, kind: output, shape index: {1}]
  %s11 = inlined_call_operand.vmem [shape: f32[2,8,32], index: 11, kind: output, shape index: {2}]
  %12 = xla_tuple %s9, %s10, %s11
  %s13 = sld [smem:[#allocation0]]
  $region62: #{sentiment_rnn_forward.1} parent=0
    _
  %s15 = ssub.s32 1, %s13
  %s16 = scalar_select 0, %s15, %s13
  %v17 = vstv %s8
  %18 = vst [vmem:[#allocation3] sm:$0x1] %v17
  // Predicated region
  $region2: #{sentiment_rnn_forward.1} parent=0 // pred_check
    _
  $region3: #{sentiment_rnn_forward.1} parent=0 // pred_check_branch
    %20 = sbr.rel (0) target = $region5
  $region4: #{sentiment_rnn_forward.1} parent=0 // pred_region
    _
  $region5: #{sentiment_rnn_forward.1} parent=0 // pred_fallthru
    _
  // Predicated region
  $region6: #{sentiment_rnn_forward.1} parent=0 // pred_check
    _
  $region7: #{sentiment_rnn_forward.1} parent=0 // pred_check_branch
    %22 = sbr.rel (0) target = $region9
  $region8: #{sentiment_rnn_forward.1} parent=0 // pred_region
    _
  $region9: #{sentiment_rnn_forward.1} parent=0 // pred_fallthru
    _
  // Predicated region
  $region10: #{sentiment_rnn_forward.1} parent=0 // pred_check
    _
  $region11: #{sentiment_rnn_forward.1} parent=0 // pred_check_branch
    %24 = sbr.rel (0) target = $region13
  $region12: #{sentiment_rnn_forward.1} parent=0 // pred_region
    _
  $region13: #{sentiment_rnn_forward.1} parent=0 // pred_fallthru
    _
  // Predicated region
  $region14: #{sentiment_rnn_forward.1} parent=0 // pred_check
    _
  $region15: #{sentiment_rnn_forward.1} parent=0 // pred_check_branch
    %26 = sbr.rel (0) target = $region17
  $region16: #{sentiment_rnn_forward.1} parent=0 // pred_region
    _
  $region17: #{sentiment_rnn_forward.1} parent=0 // pred_fallthru
    _
  // Predicated region
  $region18: #{sentiment_rnn_forward.1} parent=0 // pred_check
    _
  $region19: #{sentiment_rnn_forward.1} parent=0 // pred_check_branch
    %28 = sbr.rel (0) target = $region21
  $region20: #{sentiment_rnn_forward.1} parent=0 // pred_region
    _
  $region21: #{sentiment_rnn_forward.1} parent=0 // pred_fallthru
    _
  // Predicated region
  $region22: #{sentiment_rnn_forward.1} parent=0 // pred_check
    _
  $region23: #{sentiment_rnn_forward.1} parent=0 // pred_check_branch
    %30 = sbr.rel (0) target = $region25
  $region24: #{sentiment_rnn_forward.1} parent=0 // pred_region
    _
  $region25: #{sentiment_rnn_forward.1} parent=0 // pred_fallthru
    _
  // Predicated region
  $region26: #{sentiment_rnn_forward.1} parent=0 // pred_check
    _
  $region27: #{sentiment_rnn_forward.1} parent=0 // pred_check_branch
    %32 = sbr.rel (0) target = $region29
  $region28: #{sentiment_rnn_forward.1} parent=0 // pred_region
    _
  $region29: #{sentiment_rnn_forward.1} parent=0 // pred_fallthru
    _
  // Predicated region
  $region30: #{sentiment_rnn_forward.1} parent=0 // pred_check
    _
  $region31: #{sentiment_rnn_forward.1} parent=0 // pred_check_branch
    %34 = sbr.rel (0) target = $region33
  $region32: #{sentiment_rnn_forward.1} parent=0 // pred_region
    _
  $region33: #{sentiment_rnn_forward.1} parent=0 // pred_fallthru
    _
  // Predicated region
  $region34: #{sentiment_rnn_forward.1} parent=0 // pred_check
    _
  $region35: #{sentiment_rnn_forward.1} parent=0 // pred_check_branch
    %36 = sbr.rel (0) target = $region37
  $region36: #{sentiment_rnn_forward.1} parent=0 // pred_region
    _
  $region37: #{sentiment_rnn_forward.1} parent=0 // pred_fallthru
    _
  %v38 = vld [vmem:[%s0] sm:$0xff]
  %v39 = vld [vmem:[%s0 + $0x8] sm:$0xff]
  %v40 = vld [vmem:[%s0 + $0x10] sm:$0xff]
  %v41 = vld [vmem:[%s0 + $0x18] sm:$0xff]
  %v42 = vld [vmem:[%s0 + $0x20] sm:$0xff]
  %v43 = vld [vmem:[%s0 + $0x28] sm:$0xff]
  %v44 = vld [vmem:[%s0 + $0x30] sm:$0xff]
  %v45 = vld [vmem:[%s0 + $0x38] sm:$0xff]
  %v46 = vlaneseq
  %v47 = vand.u32 %v46, 127
  %48 = vset.pattern.permute.xlu0 0
  %49 = vperm.xlu0 %48, %v38
  %v50 = vpop.permute.xlu0 %49
  %51 = vset.pattern.permute.xlu0 0
  %52 = vperm.xlu0 %51, %v39
  %v53 = vpop.permute.xlu0 %52
  %54 = vset.pattern.permute.xlu0 0
  %55 = vperm.xlu0 %54, %v40
  %v56 = vpop.permute.xlu0 %55
  %57 = vset.pattern.permute.xlu0 0
  %58 = vperm.xlu0 %57, %v41
  %v59 = vpop.permute.xlu0 %58
  %60 = vset.pattern.permute.xlu0 0
  %61 = vperm.xlu0 %60, %v42
  %v62 = vpop.permute.xlu0 %61
  %63 = vset.pattern.permute.xlu0 0
  %64 = vperm.xlu0 %63, %v43
  %v65 = vpop.permute.xlu0 %64
  %66 = vset.pattern.permute.xlu0 0
  %67 = vperm.xlu0 %66, %v44
  %v68 = vpop.permute.xlu0 %67
  %69 = vset.pattern.permute.xlu0 0
  %70 = vperm.xlu0 %69, %v45
  %v71 = vpop.permute.xlu0 %70
  %vm72 = vcmp.eq.s32.totalorder %v50, %v47
  %vm73 = vcmp.eq.s32.totalorder %v53, %v47
  %vm74 = vcmp.eq.s32.totalorder %v56, %v47
  %vm75 = vcmp.eq.s32.totalorder %v59, %v47
  %vm76 = vcmp.eq.s32.totalorder %v62, %v47
  %vm77 = vcmp.eq.s32.totalorder %v65, %v47
  %vm78 = vcmp.eq.s32.totalorder %v68, %v47
  %vm79 = vcmp.eq.s32.totalorder %v71, %v47
  %v80 = vsel %vm72, 1, 0
  %v81 = vsel %vm73, 1, 0
  %v82 = vsel %vm74, 1, 0
  %v83 = vsel %vm75, 1, 0
  %v84 = vsel %vm76, 1, 0
  %v85 = vsel %vm77, 1, 0
  %v86 = vsel %vm78, 1, 0
  %v87 = vsel %vm79, 1, 0
  %v88 = vcvt.s32.f32 %v80
  %v89 = vcvt.s32.f32 %v81
  %v90 = vcvt.s32.f32 %v82
  %v91 = vcvt.s32.f32 %v83
  %v92 = vcvt.s32.f32 %v84
  %v93 = vcvt.s32.f32 %v85
  %v94 = vcvt.s32.f32 %v86
  %v95 = vcvt.s32.f32 %v87
  %v96 = vpack.c.bf16 %v89, %v88
  %v97 = vpack.c.bf16 %v91, %v90
  %v98 = vpack.c.bf16 %v93, %v92
  %v99 = vpack.c.bf16 %v95, %v94
  %v100 = vld [vmem:[%s1] sm:$0xf]
  %v101 = vld [vmem:[%s1 + $0x4] sm:$0xf]
  %v102 = vld [vmem:[%s1 + $0x8] sm:$0xf]
  %v103 = vld [vmem:[%s1 + $0xc] sm:$0xf]
  %v104 = vld [vmem:[%s1 + $0x10] sm:$0xf]
  %v105 = vld [vmem:[%s1 + $0x14] sm:$0xf]
  %v106 = vld [vmem:[%s1 + $0x18] sm:$0xf]
  %v107 = vld [vmem:[%s1 + $0x1c] sm:$0xf]
  %v108 = vld [vmem:[%s1 + $0x20] sm:$0xf]
  %v109 = vld [vmem:[%s1 + $0x24] sm:$0xf]
  %v110 = vld [vmem:[%s1 + $0x28] sm:$0xf]
  %v111 = vld [vmem:[%s1 + $0x2c] sm:$0xf]
  %v112 = vld [vmem:[%s1 + $0x30] sm:$0xf]
  %v113 = vld [vmem:[%s1 + $0x34] sm:$0xf]
  %v114 = vld [vmem:[%s1 + $0x38] sm:$0xf]
  %v115 = vld [vmem:[%s1 + $0x3c] sm:$0xf]
  %v132 = vunpack.c.l.b16 %v100
  %v133 = vunpack.c.l.b16 %v101
  %v134 = vunpack.c.l.b16 %v102
  %v135 = vunpack.c.l.b16 %v103
  %v136 = vunpack.c.l.b16 %v104
  %v137 = vunpack.c.l.b16 %v105
  %v138 = vunpack.c.l.b16 %v106
  %v139 = vunpack.c.l.b16 %v107
  %v140 = vunpack.c.l.b16 %v108
  %v141 = vunpack.c.l.b16 %v109
  %v142 = vunpack.c.l.b16 %v110
  %v143 = vunpack.c.l.b16 %v111
  %v144 = vunpack.c.l.b16 %v112
  %v145 = vunpack.c.l.b16 %v113
  %v146 = vunpack.c.l.b16 %v114
  %v147 = vunpack.c.l.b16 %v115
  %v148 = vpack.c.b16 %v133, %v132
  %v149 = vpack.c.b16 %v135, %v134
  %v150 = vpack.c.b16 %v137, %v136
  %v151 = vpack.c.b16 %v139, %v138
  %v152 = vpack.c.b16 %v141, %v140
  %v153 = vpack.c.b16 %v143, %v142
  %v154 = vpack.c.b16 %v145, %v144
  %v155 = vpack.c.b16 %v147, %v146
  %164 = vmatprep.subr.bf16.mxu0 0
  %165 = vmatpush1.bf16.msra.mxu0 %v148
  %166 = vmatprep.subr.bf16.mxu0 0
  %167 = vmatpush1.bf16.msra.mxu0 %v149
  %168 = vmatprep.subr.bf16.mxu0 0
  %169 = vmatpush1.bf16.msra.mxu0 %v150
  %170 = vmatprep.subr.bf16.mxu0 0
  %171 = vmatpush1.bf16.msra.mxu0 %v151
  %172 = vmatprep.subr.bf16.mxu0 0
  %173 = vmatpush1.bf16.msra.mxu0 %v152
  %174 = vmatprep.subr.bf16.mxu0 0
  %175 = vmatpush1.bf16.msra.mxu0 %v153
  %176 = vmatprep.subr.bf16.mxu0 0
  %177 = vmatpush1.bf16.msra.mxu0 %v154
  %178 = vmatprep.subr.bf16.mxu0 0
  %179 = vmatpush1.bf16.msra.mxu0 %v155
  %180 = vmatprep.subr.bf16.mxu0 0
  %181 = vmatpush1.bf16.msra.mxu0 0
  %182 = vmatprep.subr.bf16.mxu0 0
  %183 = vmatpush1.bf16.msra.mxu0 0
  %184 = vmatprep.subr.bf16.mxu0 0
  %185 = vmatpush1.bf16.msra.mxu0 0
  %186 = vmatprep.subr.bf16.mxu0 0
  %187 = vmatpush1.bf16.msra.mxu0 0
  %188 = vmatprep.subr.bf16.mxu0 0
  %189 = vmatpush1.bf16.msra.mxu0 0
  %190 = vmatprep.subr.bf16.mxu0 0
  %191 = vmatpush1.bf16.msra.mxu0 0
  %192 = vmatprep.subr.bf16.mxu0 0
  %193 = vmatpush1.bf16.msra.mxu0 0
  %194 = vmatprep.subr.bf16.mxu0 0
  %195 = vmatpush1.bf16.msra.mxu0 0
  %196 = vmatprep.mubr.bf16.mxu0 0
  %197 = vmatmul.mubr.bf16.gmra.mrb[0].mxu0 %v96
  %v198 = vpop.f32.mrb[0].mxu0
  %v199 = vadd.f32 0.0, %v198
  %v200 = vpop.f32.mrb[0].mxu0
  %v201 = vpop.f32.mrb[0].mxu0
  %v202 = vadd.f32 0.0, %v201
  %v203 = vpop.f32.mrb[0].mxu0
  %204 = vmatprep.mubr.bf16.mxu0 0
  %205 = vmatmul.mubr.bf16.gmra.mrb[0].mxu0 %v97
  %v206 = vpop.f32.mrb[0].mxu0
  %v207 = vadd.f32 0.0, %v206
  %v208 = vpop.f32.mrb[0].mxu0
  %v209 = vpop.f32.mrb[0].mxu0
  %v210 = vadd.f32 0.0, %v209
  %v211 = vpop.f32.mrb[0].mxu0
  %212 = vmatprep.mubr.bf16.mxu0 0
  %213 = vmatmul.mubr.bf16.gmra.mrb[0].mxu0 %v98
  %v214 = vpop.f32.mrb[0].mxu0
  %v215 = vadd.f32 0.0, %v214
  %v216 = vpop.f32.mrb[0].mxu0
  %v217 = vpop.f32.mrb[0].mxu0
  %v218 = vadd.f32 0.0, %v217
  %v219 = vpop.f32.mrb[0].mxu0
  %220 = vmatprep.mubr.bf16.mxu0 0
  %221 = vmatmul.mubr.bf16.gmra.mrb[0].mxu0 %v99
  %v222 = vpop.f32.mrb[0].mxu0
  %v223 = vadd.f32 0.0, %v222
  %v224 = vpop.f32.mrb[0].mxu0
  %v225 = vpop.f32.mrb[0].mxu0
  %v226 = vadd.f32 0.0, %v225
  %v227 = vpop.f32.mrb[0].mxu0
  %228 = vdwg.mxu0
  %v229 = vld [vmem:[%s2] sm:$0x1]
  %v231 = vlaneseq
  %v232 = vshrl.u32 %v231, 7
  %v233 = vsub.s32 0, %v232
  %v234 = vrot.slane %v229, %v233
  %v236 = vadd.f32 %v199, %v234
  %v237 = vadd.f32 %v202, %v234
  %v238 = vadd.f32 %v207, %v234
  %v239 = vadd.f32 %v210, %v234
  %v240 = vadd.f32 %v215, %v234
  %v241 = vadd.f32 %v218, %v234
  %v242 = vadd.f32 %v223, %v234
  %v243 = vadd.f32 %v226, %v234
  %244 = vst [vmem:[#allocation2] sm:$0xff] %v236
  %245 = vst [vmem:[#allocation2 + $0x8] sm:$0xff] %v237
  %246 = vst [vmem:[#allocation2 + $0x10] sm:$0xff] %v238
  %247 = vst [vmem:[#allocation2 + $0x18] sm:$0xff] %v239
  %248 = vst [vmem:[#allocation2 + $0x20] sm:$0xff] %v240
  %249 = vst [vmem:[#allocation2 + $0x28] sm:$0xff] %v241
  %250 = vst [vmem:[#allocation2 + $0x30] sm:$0xff] %v242
  %251 = vst [vmem:[#allocation2 + $0x38] sm:$0xff] %v243
  %v252 = vld [vmem:[%s3] sm:$0xf]
  %v253 = vld [vmem:[%s3 + $0x4] sm:$0xf]
  %v254 = vld [vmem:[%s3 + $0x8] sm:$0xf]
  %v255 = vld [vmem:[%s3 + $0xc] sm:$0xf]
  %v256 = vld [vmem:[%s5] sm:$0xf]
  %v257 = vld [vmem:[%s5 + $0x4] sm:$0xf]
  %v258 = vld [vmem:[%s5 + $0x8] sm:$0xf]
  %v259 = vld [vmem:[%s5 + $0xc] sm:$0xf]
  %v260 = vld [vmem:[%s4] sm:$0xf]
  %v261 = vld [vmem:[%s4 + $0x4] sm:$0xf]
  %v262 = vld [vmem:[%s4 + $0x8] sm:$0xf]
  %v263 = vld [vmem:[%s4 + $0xc] sm:$0xf]
  %v264 = vld [vmem:[%s6] sm:$0x1]
  %v266 = vlaneseq
  %v267 = vshrl.u32 %v266, 7
  %v268 = vsub.s32 0, %v267
  %v269 = vrot.slane %v264, %v268
  %v271 = vld [vmem:[#allocation2] sm:$0xff]
  %v276 = vunpack.c.l.b16 %v252
  %v277 = vunpack.c.l.b16 %v253
  %v278 = vunpack.c.l.b16 %v254
  %v279 = vunpack.c.l.b16 %v255
  %v280 = vpack.c.b16 %v277, %v276
  %v281 = vpack.c.b16 %v279, %v278
  %vm284 = vcmask 261120
  %v286 = vsel %vm284, 0, 0
  %288 = vmatprep.subr.bf16.mxu0 0
  %289 = vmatpush1.bf16.msra.mxu0 %v280
  %290 = vmatprep.subr.bf16.mxu0 0
  %291 = vmatpush1.bf16.msra.mxu0 %v281
  %292 = vmatprep.subr.bf16.mxu0 0
  %293 = vmatpush1.bf16.msra.mxu0 0
  %294 = vmatprep.subr.bf16.mxu0 0
  %295 = vmatpush1.bf16.msra.mxu0 0
  %296 = vmatprep.subr.bf16.mxu0 0
  %297 = vmatpush1.bf16.msra.mxu0 0
  %298 = vmatprep.subr.bf16.mxu0 0
  %299 = vmatpush1.bf16.msra.mxu0 0
  %300 = vmatprep.subr.bf16.mxu0 0
  %301 = vmatpush1.bf16.msra.mxu0 0
  %302 = vmatprep.subr.bf16.mxu0 0
  %303 = vmatpush1.bf16.msra.mxu0 0
  %304 = vmatprep.subr.bf16.mxu0 0
  %305 = vmatpush1.bf16.msra.mxu0 0
  %306 = vmatprep.subr.bf16.mxu0 0
  %307 = vmatpush1.bf16.msra.mxu0 0
  %308 = vmatprep.subr.bf16.mxu0 0
  %309 = vmatpush1.bf16.msra.mxu0 0
  %310 = vmatprep.subr.bf16.mxu0 0
  %311 = vmatpush1.bf16.msra.mxu0 0
  %312 = vmatprep.subr.bf16.mxu0 0
  %313 = vmatpush1.bf16.msra.mxu0 0
  %314 = vmatprep.subr.bf16.mxu0 0
  %315 = vmatpush1.bf16.msra.mxu0 0
  %316 = vmatprep.subr.bf16.mxu0 0
  %317 = vmatpush1.bf16.msra.mxu0 0
  %318 = vmatprep.subr.bf16.mxu0 0
  %319 = vmatpush1.bf16.msra.mxu0 0
  %320 = vmatprep.mubr.bf16.mxu0 0
  %321 = vmatmul.mubr.bf16.gmra.mrb[0].mxu0 %v286
  %v322 = vpop.f32.mrb[0].mxu0
  %v323 = vadd.f32 0.0, %v322
  %v324 = vpop.f32.mrb[0].mxu0
  %v325 = vpop.f32.mrb[0].mxu0
  %v326 = vpop.f32.mrb[0].mxu0
  %327 = vdwg.mxu0
  %v328 = vadd.f32 %v271, %v323
  %v329 = vxor.u32 %v328, 2147483648
  %v330 = vmul.f32 %v329, 1.442695
  %v331 = vpow.pop %v330
  %v332 = vadd.f32 %v331, 1.0
  %v333 = vrcp.pop %v332
  %v334 = vmul.f32 1.0, %v333
  %v335 = vtanh.pop %v328
  %v336 = vmul.f32 %v334, 0.0
  %338 = vrot.lane.b32.xlu0 %v335, 64
  %v339 = vpop.permute.xlu0 %338
  %v341 = vmul.f32 %v334, %v339
  %343 = vrot.lane.b32.xlu0 %v341, 32
  %v344 = vpop.permute.xlu0 %343
  %v346 = vadd.f32 %v336, %v344
  %v347 = vtanh.pop %v346
  %349 = vrot.lane.b32.xlu0 %v347, 64
  %v350 = vpop.permute.xlu0 %349
  %v352 = vmul.f32 %v334, %v350
  %v353 = vpack.c.bf16 %v352, %v352
  %v358 = vunpack.c.l.b16 %v256
  %v359 = vunpack.c.l.b16 %v257
  %v360 = vunpack.c.l.b16 %v258
  %v361 = vunpack.c.l.b16 %v259
  %v362 = vpack.c.b16 %v359, %v358
  %v363 = vpack.c.b16 %v361, %v360
  %366 = vmatprep.subr.bf16.mxu0 0
  %367 = vmatpush1.bf16.msra.mxu0 %v362
  %368 = vmatprep.subr.bf16.mxu0 0
  %369 = vmatpush1.bf16.msra.mxu0 %v363
  %370 = vmatprep.subr.bf16.mxu0 0
  %371 = vmatpush1.bf16.msra.mxu0 0
  %372 = vmatprep.subr.bf16.mxu0 0
  %373 = vmatpush1.bf16.msra.mxu0 0
  %374 = vmatprep.subr.bf16.mxu0 0
  %375 = vmatpush1.bf16.msra.mxu0 0
  %376 = vmatprep.subr.bf16.mxu0 0
  %377 = vmatpush1.bf16.msra.mxu0 0
  %378 = vmatprep.subr.bf16.mxu0 0
  %379 = vmatpush1.bf16.msra.mxu0 0
  %380 = vmatprep.subr.bf16.mxu0 0
  %381 = vmatpush1.bf16.msra.mxu0 0
  %382 = vmatprep.subr.bf16.mxu0 0
  %383 = vmatpush1.bf16.msra.mxu0 0
  %384 = vmatprep.subr.bf16.mxu0 0
  %385 = vmatpush1.bf16.msra.mxu0 0
  %386 = vmatprep.subr.bf16.mxu0 0
  %387 = vmatpush1.bf16.msra.mxu0 0
  %388 = vmatprep.subr.bf16.mxu0 0
  %389 = vmatpush1.bf16.msra.mxu0 0
  %390 = vmatprep.subr.bf16.mxu0 0
  %391 = vmatpush1.bf16.msra.mxu0 0
  %392 = vmatprep.subr.bf16.mxu0 0
  %393 = vmatpush1.bf16.msra.mxu0 0
  %394 = vmatprep.subr.bf16.mxu0 0
  %395 = vmatpush1.bf16.msra.mxu0 0
  %396 = vmatprep.subr.bf16.mxu0 0
  %397 = vmatpush1.bf16.msra.mxu0 0
  %398 = vmatprep.mubr.bf16.mxu0 0
  %399 = vmatmul.mubr.bf16.gmra.mrb[0].mxu0 %v286
  %v400 = vpop.f32.mrb[0].mxu0
  %v401 = vadd.f32 0.0, %v400
  %v402 = vpop.f32.mrb[0].mxu0
  %v403 = vpop.f32.mrb[0].mxu0
  %v404 = vpop.f32.mrb[0].mxu0
  %405 = vdwg.mxu0
  %407 = vrot.lane.b32.xlu0 %v353, 32
  %v408 = vpop.permute.xlu0 %407
  %v413 = vunpack.c.l.b16 %v260
  %v414 = vunpack.c.l.b16 %v261
  %v415 = vunpack.c.l.b16 %v262
  %v416 = vunpack.c.l.b16 %v263
  %v417 = vpack.c.b16 %v414, %v413
  %v418 = vpack.c.b16 %v416, %v415
  %v422 = vsel %vm284, %v408, 0
  %424 = vmatprep.subr.bf16.mxu0 0
  %425 = vmatpush1.bf16.msra.mxu0 %v417
  %426 = vmatprep.subr.bf16.mxu0 0
  %427 = vmatpush1.bf16.msra.mxu0 %v418
  %428 = vmatprep.subr.bf16.mxu0 0
  %429 = vmatpush1.bf16.msra.mxu0 0
  %430 = vmatprep.subr.bf16.mxu0 0
  %431 = vmatpush1.bf16.msra.mxu0 0
  %432 = vmatprep.subr.bf16.mxu0 0
  %433 = vmatpush1.bf16.msra.mxu0 0
  %434 = vmatprep.subr.bf16.mxu0 0
  %435 = vmatpush1.bf16.msra.mxu0 0
  %436 = vmatprep.subr.bf16.mxu0 0
  %437 = vmatpush1.bf16.msra.mxu0 0
  %438 = vmatprep.subr.bf16.mxu0 0
  %439 = vmatpush1.bf16.msra.mxu0 0
  %440 = vmatprep.subr.bf16.mxu0 0
  %441 = vmatpush1.bf16.msra.mxu0 0
  %442 = vmatprep.subr.bf16.mxu0 0
  %443 = vmatpush1.bf16.msra.mxu0 0
  %444 = vmatprep.subr.bf16.mxu0 0
  %445 = vmatpush1.bf16.msra.mxu0 0
  %446 = vmatprep.subr.bf16.mxu0 0
  %447 = vmatpush1.bf16.msra.mxu0 0
  %448 = vmatprep.subr.bf16.mxu0 0
  %449 = vmatpush1.bf16.msra.mxu0 0
  %450 = vmatprep.subr.bf16.mxu0 0
  %451 = vmatpush1.bf16.msra.mxu0 0
  %452 = vmatprep.subr.bf16.mxu0 0
  %453 = vmatpush1.bf16.msra.mxu0 0
  %454 = vmatprep.subr.bf16.mxu0 0
  %455 = vmatpush1.bf16.msra.mxu0 0
  %456 = vmatprep.mubr.bf16.mxu0 0
  %457 = vmatmul.mubr.bf16.gmra.mrb[0].mxu0 %v422
  %v458 = vpop.f32.mrb[0].mxu0
  %v459 = vadd.f32 %v401, %v458
  %v460 = vpop.f32.mrb[0].mxu0
  %v461 = vpop.f32.mrb[0].mxu0
  %v462 = vpop.f32.mrb[0].mxu0
  %463 = vdwg.mxu0
  %v464 = vadd.f32 %v459, %v269
  %v465 = vxor.u32 %v464, 2147483648
  %v466 = vmul.f32 %v465, 1.442695
  %v467 = vpow.pop %v466
  %v468 = vadd.f32 %v467, 1.0
  %v469 = vrcp.pop %v468
  %v470 = vmul.f32 1.0, %v469
  %v471 = vtanh.pop %v464
  %v472 = vmul.f32 %v470, 0.0
  %474 = vrot.lane.b32.xlu0 %v471, 64
  %v475 = vpop.permute.xlu0 %474
  %v477 = vmul.f32 %v470, %v475
  %479 = vrot.lane.b32.xlu0 %v477, 32
  %v480 = vpop.permute.xlu0 %479
  %v482 = vadd.f32 %v472, %v480
  %v483 = vtanh.pop %v482
  %485 = vrot.lane.b32.xlu0 %v483, 64
  %v486 = vpop.permute.xlu0 %485
  %v488 = vmul.f32 %v470, %v486
  %s489 = scalar_lea.vmem [#allocation2], 8
  %v490 = vld [vmem:[%s489] sm:$0xff]
  %491 = vmatprep.subr.bf16.mxu0 0
  %492 = vmatpush1.bf16.msra.mxu0 %v280
  %493 = vmatprep.subr.bf16.mxu0 0
  %494 = vmatpush1.bf16.msra.mxu0 %v281
  %495 = vmatprep.subr.bf16.mxu0 0
  %496 = vmatpush1.bf16.msra.mxu0 0
  %497 = vmatprep.subr.bf16.mxu0 0
  %498 = vmatpush1.bf16.msra.mxu0 0
  %499 = vmatprep.subr.bf16.mxu0 0
  %500 = vmatpush1.bf16.msra.mxu0 0
  %501 = vmatprep.subr.bf16.mxu0 0
  %502 = vmatpush1.bf16.msra.mxu0 0
  %503 = vmatprep.subr.bf16.mxu0 0
  %504 = vmatpush1.bf16.msra.mxu0 0
  %505 = vmatprep.subr.bf16.mxu0 0
  %506 = vmatpush1.bf16.msra.mxu0 0
  %507 = vmatprep.subr.bf16.mxu0 0
  %508 = vmatpush1.bf16.msra.mxu0 0
  %509 = vmatprep.subr.bf16.mxu0 0
  %510 = vmatpush1.bf16.msra.mxu0 0
  %511 = vmatprep.subr.bf16.mxu0 0
  %512 = vmatpush1.bf16.msra.mxu0 0
  %513 = vmatprep.subr.bf16.mxu0 0
  %514 = vmatpush1.bf16.msra.mxu0 0
  %515 = vmatprep.subr.bf16.mxu0 0
  %516 = vmatpush1.bf16.msra.mxu0 0
  %517 = vmatprep.subr.bf16.mxu0 0
  %518 = vmatpush1.bf16.msra.mxu0 0
  %519 = vmatprep.subr.bf16.mxu0 0
  %520 = vmatpush1.bf16.msra.mxu0 0
  %521 = vmatprep.subr.bf16.mxu0 0
  %522 = vmatpush1.bf16.msra.mxu0 0
  %523 = vmatprep.mubr.bf16.mxu0 0
  %524 = vmatmul.mubr.bf16.gmra.mrb[0].mxu0 %v422
  %v525 = vpop.f32.mrb[0].mxu0
  %v526 = vadd.f32 0.0, %v525
  %v527 = vpop.f32.mrb[0].mxu0
  %v528 = vpop.f32.mrb[0].mxu0
  %v529 = vpop.f32.mrb[0].mxu0
  %530 = vdwg.mxu0
  %v531 = vadd.f32 %v490, %v526
  %v532 = vxor.u32 %v531, 2147483648
  %v533 = vmul.f32 %v532, 1.442695
  %v534 = vpow.pop %v533
  %v535 = vadd.f32 %v534, 1.0
  %v536 = vrcp.pop %v535
  %v537 = vmul.f32 1.0, %v536
  %v538 = vtanh.pop %v531
  %v539 = vmul.f32 %v537, %v346
  %541 = vrot.lane.b32.xlu0 %v538, 64
  %v542 = vpop.permute.xlu0 %541
  %v544 = vmul.f32 %v537, %v542
  %546 = vrot.lane.b32.xlu0 %v544, 32
  %v547 = vpop.permute.xlu0 %546
  %v549 = vadd.f32 %v539, %v547
  %v550 = vtanh.pop %v549
  %552 = vrot.lane.b32.xlu0 %v550, 64
  %v553 = vpop.permute.xlu0 %552
  %v555 = vmul.f32 %v537, %v553
  %v556 = vpack.c.bf16 %v555, %v555
  %v557 = vpack.c.bf16 %v488, %v488
  %559 = vrot.lane.b32.xlu0 %v557, 32
  %v560 = vpop.permute.xlu0 %559
  %v562 = vsel %vm284, %v560, 0
  %564 = vmatprep.subr.bf16.mxu0 0
  %565 = vmatpush1.bf16.msra.mxu0 %v362
  %566 = vmatprep.subr.bf16.mxu0 0
  %567 = vmatpush1.bf16.msra.mxu0 %v363
  %568 = vmatprep.subr.bf16.mxu0 0
  %569 = vmatpush1.bf16.msra.mxu0 0
  %570 = vmatprep.subr.bf16.mxu0 0
  %571 = vmatpush1.bf16.msra.mxu0 0
  %572 = vmatprep.subr.bf16.mxu0 0
  %573 = vmatpush1.bf16.msra.mxu0 0
  %574 = vmatprep.subr.bf16.mxu0 0
  %575 = vmatpush1.bf16.msra.mxu0 0
  %576 = vmatprep.subr.bf16.mxu0 0
  %577 = vmatpush1.bf16.msra.mxu0 0
  %578 = vmatprep.subr.bf16.mxu0 0
  %579 = vmatpush1.bf16.msra.mxu0 0
  %580 = vmatprep.subr.bf16.mxu0 0
  %581 = vmatpush1.bf16.msra.mxu0 0
  %582 = vmatprep.subr.bf16.mxu0 0
  %583 = vmatpush1.bf16.msra.mxu0 0
  %584 = vmatprep.subr.bf16.mxu0 0
  %585 = vmatpush1.bf16.msra.mxu0 0
  %586 = vmatprep.subr.bf16.mxu0 0
  %587 = vmatpush1.bf16.msra.mxu0 0
  %588 = vmatprep.subr.bf16.mxu0 0
  %589 = vmatpush1.bf16.msra.mxu0 0
  %590 = vmatprep.subr.bf16.mxu0 0
  %591 = vmatpush1.bf16.msra.mxu0 0
  %592 = vmatprep.subr.bf16.mxu0 0
  %593 = vmatpush1.bf16.msra.mxu0 0
  %594 = vmatprep.subr.bf16.mxu0 0
  %595 = vmatpush1.bf16.msra.mxu0 0
  %596 = vmatprep.mubr.bf16.mxu0 0
  %597 = vmatmul.mubr.bf16.gmra.mrb[0].mxu0 %v562
  %v598 = vpop.f32.mrb[0].mxu0
  %v599 = vadd.f32 0.0, %v598
  %v600 = vpop.f32.mrb[0].mxu0
  %v601 = vpop.f32.mrb[0].mxu0
  %v602 = vpop.f32.mrb[0].mxu0
  %603 = vdwg.mxu0
  %605 = vrot.lane.b32.xlu0 %v556, 32
  %v606 = vpop.permute.xlu0 %605
  %v608 = vsel %vm284, %v606, 0
  %610 = vmatprep.subr.bf16.mxu0 0
  %611 = vmatpush1.bf16.msra.mxu0 %v417
  %612 = vmatprep.subr.bf16.mxu0 0
  %613 = vmatpush1.bf16.msra.mxu0 %v418
  %614 = vmatprep.subr.bf16.mxu0 0
  %615 = vmatpush1.bf16.msra.mxu0 0
  %616 = vmatprep.subr.bf16.mxu0 0
  %617 = vmatpush1.bf16.msra.mxu0 0
  %618 = vmatprep.subr.bf16.mxu0 0
  %619 = vmatpush1.bf16.msra.mxu0 0
  %620 = vmatprep.subr.bf16.mxu0 0
  %621 = vmatpush1.bf16.msra.mxu0 0
  %622 = vmatprep.subr.bf16.mxu0 0
  %623 = vmatpush1.bf16.msra.mxu0 0
  %624 = vmatprep.subr.bf16.mxu0 0
  %625 = vmatpush1.bf16.msra.mxu0 0
  %626 = vmatprep.subr.bf16.mxu0 0
  %627 = vmatpush1.bf16.msra.mxu0 0
  %628 = vmatprep.subr.bf16.mxu0 0
  %629 = vmatpush1.bf16.msra.mxu0 0
  %630 = vmatprep.subr.bf16.mxu0 0
  %631 = vmatpush1.bf16.msra.mxu0 0
  %632 = vmatprep.subr.bf16.mxu0 0
  %633 = vmatpush1.bf16.msra.mxu0 0
  %634 = vmatprep.subr.bf16.mxu0 0
  %635 = vmatpush1.bf16.msra.mxu0 0
  %636 = vmatprep.subr.bf16.mxu0 0
  %637 = vmatpush1.bf16.msra.mxu0 0
  %638 = vmatprep.subr.bf16.mxu0 0
  %639 = vmatpush1.bf16.msra.mxu0 0
  %640 = vmatprep.subr.bf16.mxu0 0
  %641 = vmatpush1.bf16.msra.mxu0 0
  %642 = vmatprep.mubr.bf16.mxu0 0
  %643 = vmatmul.mubr.bf16.gmra.mrb[0].mxu0 %v608
  %v644 = vpop.f32.mrb[0].mxu0
  %v645 = vadd.f32 %v599, %v644
  %v646 = vpop.f32.mrb[0].mxu0
  %v647 = vpop.f32.mrb[0].mxu0
  %v648 = vpop.f32.mrb[0].mxu0
  %649 = vdwg.mxu0
  %v650 = vadd.f32 %v645, %v269
  %v651 = vxor.u32 %v650, 2147483648
  %v652 = vmul.f32 %v651, 1.442695
  %v653 = vpow.pop %v652
  %v654 = vadd.f32 %v653, 1.0
  %v655 = vrcp.pop %v654
  %v656 = vmul.f32 1.0, %v655
  %v657 = vtanh.pop %v650
  %v658 = vmul.f32 %v656, %v482
  %660 = vrot.lane.b32.xlu0 %v657, 64
  %v661 = vpop.permute.xlu0 %660
  %v663 = vmul.f32 %v656, %v661
  %665 = vrot.lane.b32.xlu0 %v663, 32
  %v666 = vpop.permute.xlu0 %665
  %v668 = vadd.f32 %v658, %v666
  %v669 = vtanh.pop %v668
  %671 = vrot.lane.b32.xlu0 %v669, 64
  %v672 = vpop.permute.xlu0 %671
  %v674 = vmul.f32 %v656, %v672
  %s675 = scalar_lea.vmem [#allocation2], 16
  %v676 = vld [vmem:[%s675] sm:$0xff]
  %677 = vmatprep.subr.bf16.mxu0 0
  %678 = vmatpush1.bf16.msra.mxu0 %v280
  %679 = vmatprep.subr.bf16.mxu0 0
  %680 = vmatpush1.bf16.msra.mxu0 %v281
  %681 = vmatprep.subr.bf16.mxu0 0
  %682 = vmatpush1.bf16.msra.mxu0 0
  %683 = vmatprep.subr.bf16.mxu0 0
  %684 = vmatpush1.bf16.msra.mxu0 0
  %685 = vmatprep.subr.bf16.mxu0 0
  %686 = vmatpush1.bf16.msra.mxu0 0
  %687 = vmatprep.subr.bf16.mxu0 0
  %688 = vmatpush1.bf16.msra.mxu0 0
  %689 = vmatprep.subr.bf16.mxu0 0
  %690 = vmatpush1.bf16.msra.mxu0 0
  %691 = vmatprep.subr.bf16.mxu0 0
  %692 = vmatpush1.bf16.msra.mxu0 0
  %693 = vmatprep.subr.bf16.mxu0 0
  %694 = vmatpush1.bf16.msra.mxu0 0
  %695 = vmatprep.subr.bf16.mxu0 0
  %696 = vmatpush1.bf16.msra.mxu0 0
  %697 = vmatprep.subr.bf16.mxu0 0
  %698 = vmatpush1.bf16.msra.mxu0 0
  %699 = vmatprep.subr.bf16.mxu0 0
  %700 = vmatpush1.bf16.msra.mxu0 0
  %701 = vmatprep.subr.bf16.mxu0 0
  %702 = vmatpush1.bf16.msra.mxu0 0
  %703 = vmatprep.subr.bf16.mxu0 0
  %704 = vmatpush1.bf16.msra.mxu0 0
  %705 = vmatprep.subr.bf16.mxu0 0
  %706 = vmatpush1.bf16.msra.mxu0 0
  %707 = vmatprep.subr.bf16.mxu0 0
  %708 = vmatpush1.bf16.msra.mxu0 0
  %709 = vmatprep.mubr.bf16.mxu0 0
  %710 = vmatmul.mubr.bf16.gmra.mrb[0].mxu0 %v608
  %v711 = vpop.f32.mrb[0].mxu0
  %v712 = vadd.f32 0.0, %v711
  %v713 = vpop.f32.mrb[0].mxu0
  %v714 = vpop.f32.mrb[0].mxu0
  %v715 = vpop.f32.mrb[0].mxu0
  %716 = vdwg.mxu0
  %v717 = vadd.f32 %v676, %v712
  %v718 = vxor.u32 %v717, 2147483648
  %v719 = vmul.f32 %v718, 1.442695
  %v720 = vpow.pop %v719
  %v721 = vadd.f32 %v720, 1.0
  %v722 = vrcp.pop %v721
  %v723 = vmul.f32 1.0, %v722
  %v724 = vtanh.pop %v717
  %v725 = vmul.f32 %v723, %v549
  %727 = vrot.lane.b32.xlu0 %v724, 64
  %v728 = vpop.permute.xlu0 %727
  %v730 = vmul.f32 %v723, %v728
  %732 = vrot.lane.b32.xlu0 %v730, 32
  %v733 = vpop.permute.xlu0 %732
  %v735 = vadd.f32 %v725, %v733
  %v736 = vtanh.pop %v735
  %738 = vrot.lane.b32.xlu0 %v736, 64
  %v739 = vpop.permute.xlu0 %738
  %v741 = vmul.f32 %v723, %v739
  %v742 = vpack.c.bf16 %v741, %v741
  %v743 = vpack.c.bf16 %v674, %v674
  %745 = vrot.lane.b32.xlu0 %v743, 32
  %v746 = vpop.permute.xlu0 %745
  %v748 = vsel %vm284, %v746, 0
  %750 = vmatprep.subr.bf16.mxu0 0
  %751 = vmatpush1.bf16.msra.mxu0 %v362
  %752 = vmatprep.subr.bf16.mxu0 0
  %753 = vmatpush1.bf16.msra.mxu0 %v363
  %754 = vmatprep.subr.bf16.mxu0 0
  %755 = vmatpush1.bf16.msra.mxu0 0
  %756 = vmatprep.subr.bf16.mxu0 0
  %757 = vmatpush1.bf16.msra.mxu0 0
  %758 = vmatprep.subr.bf16.mxu0 0
  %759 = vmatpush1.bf16.msra.mxu0 0
  %760 = vmatprep.subr.bf16.mxu0 0
  %761 = vmatpush1.bf16.msra.mxu0 0
  %762 = vmatprep.subr.bf16.mxu0 0
  %763 = vmatpush1.bf16.msra.mxu0 0
  %764 = vmatprep.subr.bf16.mxu0 0
  %765 = vmatpush1.bf16.msra.mxu0 0
  %766 = vmatprep.subr.bf16.mxu0 0
  %767 = vmatpush1.bf16.msra.mxu0 0
  %768 = vmatprep.subr.bf16.mxu0 0
  %769 = vmatpush1.bf16.msra.mxu0 0
  %770 = vmatprep.subr.bf16.mxu0 0
  %771 = vmatpush1.bf16.msra.mxu0 0
  %772 = vmatprep.subr.bf16.mxu0 0
  %773 = vmatpush1.bf16.msra.mxu0 0
  %774 = vmatprep.subr.bf16.mxu0 0
  %775 = vmatpush1.bf16.msra.mxu0 0
  %776 = vmatprep.subr.bf16.mxu0 0
  %777 = vmatpush1.bf16.msra.mxu0 0
  %778 = vmatprep.subr.bf16.mxu0 0
  %779 = vmatpush1.bf16.msra.mxu0 0
  %780 = vmatprep.subr.bf16.mxu0 0
  %781 = vmatpush1.bf16.msra.mxu0 0
  %782 = vmatprep.mubr.bf16.mxu0 0
  %783 = vmatmul.mubr.bf16.gmra.mrb[0].mxu0 %v748
  %v784 = vpop.f32.mrb[0].mxu0
  %v785 = vadd.f32 0.0, %v784
  %v786 = vpop.f32.mrb[0].mxu0
  %v787 = vpop.f32.mrb[0].mxu0
  %v788 = vpop.f32.mrb[0].mxu0
  %789 = vdwg.mxu0
  %791 = vrot.lane.b32.xlu0 %v742, 32
  %v792 = vpop.permute.xlu0 %791
  %v794 = vsel %vm284, %v792, 0
  %796 = vmatprep.subr.bf16.mxu0 0
  %797 = vmatpush1.bf16.msra.mxu0 %v417
  %798 = vmatprep.subr.bf16.mxu0 0
  %799 = vmatpush1.bf16.msra.mxu0 %v418
  %800 = vmatprep.subr.bf16.mxu0 0
  %801 = vmatpush1.bf16.msra.mxu0 0
  %802 = vmatprep.subr.bf16.mxu0 0
  %803 = vmatpush1.bf16.msra.mxu0 0
  %804 = vmatprep.subr.bf16.mxu0 0
  %805 = vmatpush1.bf16.msra.mxu0 0
  %806 = vmatprep.subr.bf16.mxu0 0
  %807 = vmatpush1.bf16.msra.mxu0 0
  %808 = vmatprep.subr.bf16.mxu0 0
  %809 = vmatpush1.bf16.msra.mxu0 0
  %810 = vmatprep.subr.bf16.mxu0 0
  %811 = vmatpush1.bf16.msra.mxu0 0
  %812 = vmatprep.subr.bf16.mxu0 0
  %813 = vmatpush1.bf16.msra.mxu0 0
  %814 = vmatprep.subr.bf16.mxu0 0
  %815 = vmatpush1.bf16.msra.mxu0 0
  %816 = vmatprep.subr.bf16.mxu0 0
  %817 = vmatpush1.bf16.msra.mxu0 0
  %818 = vmatprep.subr.bf16.mxu0 0
  %819 = vmatpush1.bf16.msra.mxu0 0
  %820 = vmatprep.subr.bf16.mxu0 0
  %821 = vmatpush1.bf16.msra.mxu0 0
  %822 = vmatprep.subr.bf16.mxu0 0
  %823 = vmatpush1.bf16.msra.mxu0 0
  %824 = vmatprep.subr.bf16.mxu0 0
  %825 = vmatpush1.bf16.msra.mxu0 0
  %826 = vmatprep.subr.bf16.mxu0 0
  %827 = vmatpush1.bf16.msra.mxu0 0
  %828 = vmatprep.mubr.bf16.mxu0 0
  %829 = vmatmul.mubr.bf16.gmra.mrb[0].mxu0 %v794
  %v830 = vpop.f32.mrb[0].mxu0
  %v831 = vadd.f32 %v785, %v830
  %v832 = vpop.f32.mrb[0].mxu0
  %v833 = vpop.f32.mrb[0].mxu0
  %v834 = vpop.f32.mrb[0].mxu0
  %835 = vdwg.mxu0
  %v836 = vadd.f32 %v831, %v269
  %v837 = vxor.u32 %v836, 2147483648
  %v838 = vmul.f32 %v837, 1.442695
  %v839 = vpow.pop %v838
  %v840 = vadd.f32 %v839, 1.0
  %v841 = vrcp.pop %v840
  %v842 = vmul.f32 1.0, %v841
  %v843 = vtanh.pop %v836
  %v844 = vmul.f32 %v842, %v668
  %846 = vrot.lane.b32.xlu0 %v843, 64
  %v847 = vpop.permute.xlu0 %846
  %v849 = vmul.f32 %v842, %v847
  %851 = vrot.lane.b32.xlu0 %v849, 32
  %v852 = vpop.permute.xlu0 %851
  %v854 = vadd.f32 %v844, %v852
  %v855 = vtanh.pop %v854
  %857 = vrot.lane.b32.xlu0 %v855, 64
  %v858 = vpop.permute.xlu0 %857
  %v860 = vmul.f32 %v842, %v858
  %s861 = scalar_lea.vmem [#allocation2], 24
  %v862 = vld [vmem:[%s861] sm:$0xff]
  %863 = vmatprep.subr.bf16.mxu0 0
  %864 = vmatpush1.bf16.msra.mxu0 %v280
  %865 = vmatprep.subr.bf16.mxu0 0
  %866 = vmatpush1.bf16.msra.mxu0 %v281
  %867 = vmatprep.subr.bf16.mxu0 0
  %868 = vmatpush1.bf16.msra.mxu0 0
  %869 = vmatprep.subr.bf16.mxu0 0
  %870 = vmatpush1.bf16.msra.mxu0 0
  %871 = vmatprep.subr.bf16.mxu0 0
  %872 = vmatpush1.bf16.msra.mxu0 0
  %873 = vmatprep.subr.bf16.mxu0 0
  %874 = vmatpush1.bf16.msra.mxu0 0
  %875 = vmatprep.subr.bf16.mxu0 0
  %876 = vmatpush1.bf16.msra.mxu0 0
  %877 = vmatprep.subr.bf16.mxu0 0
  %878 = vmatpush1.bf16.msra.mxu0 0
  %879 = vmatprep.subr.bf16.mxu0 0
  %880 = vmatpush1.bf16.msra.mxu0 0
  %881 = vmatprep.subr.bf16.mxu0 0
  %882 = vmatpush1.bf16.msra.mxu0 0
  %883 = vmatprep.subr.bf16.mxu0 0
  %884 = vmatpush1.bf16.msra.mxu0 0
  %885 = vmatprep.subr.bf16.mxu0 0
  %886 = vmatpush1.bf16.msra.mxu0 0
  %887 = vmatprep.subr.bf16.mxu0 0
  %888 = vmatpush1.bf16.msra.mxu0 0
  %889 = vmatprep.subr.bf16.mxu0 0
  %890 = vmatpush1.bf16.msra.mxu0 0
  %891 = vmatprep.subr.bf16.mxu0 0
  %892 = vmatpush1.bf16.msra.mxu0 0
  %893 = vmatprep.subr.bf16.mxu0 0
  %894 = vmatpush1.bf16.msra.mxu0 0
  %895 = vmatprep.mubr.bf16.mxu0 0
  %896 = vmatmul.mubr.bf16.gmra.mrb[0].mxu0 %v794
  %v897 = vpop.f32.mrb[0].mxu0
  %v898 = vadd.f32 0.0, %v897
  %v899 = vpop.f32.mrb[0].mxu0
  %v900 = vpop.f32.mrb[0].mxu0
  %v901 = vpop.f32.mrb[0].mxu0
  %902 = vdwg.mxu0
  %v903 = vadd.f32 %v862, %v898
  %v904 = vxor.u32 %v903, 2147483648
  %v905 = vmul.f32 %v904, 1.442695
  %v906 = vpow.pop %v905
  %v907 = vadd.f32 %v906, 1.0
  %v908 = vrcp.pop %v907
  %v909 = vmul.f32 1.0, %v908
  %v910 = vtanh.pop %v903
  %v911 = vmul.f32 %v909, %v735
  %913 = vrot.lane.b32.xlu0 %v910, 64
  %v914 = vpop.permute.xlu0 %913
  %v916 = vmul.f32 %v909, %v914
  %918 = vrot.lane.b32.xlu0 %v916, 32
  %v919 = vpop.permute.xlu0 %918
  %v921 = vadd.f32 %v911, %v919
  %v922 = vtanh.pop %v921
  %924 = vrot.lane.b32.xlu0 %v922, 64
  %v925 = vpop.permute.xlu0 %924
  %v927 = vmul.f32 %v909, %v925
  %v928 = vpack.c.bf16 %v927, %v927
  %v929 = vpack.c.bf16 %v860, %v860
  %931 = vrot.lane.b32.xlu0 %v929, 32
  %v932 = vpop.permute.xlu0 %931
  %v934 = vsel %vm284, %v932, 0
  %936 = vmatprep.subr.bf16.mxu0 0
  %937 = vmatpush1.bf16.msra.mxu0 %v362
  %938 = vmatprep.subr.bf16.mxu0 0
  %939 = vmatpush1.bf16.msra.mxu0 %v363
  %940 = vmatprep.subr.bf16.mxu0 0
  %941 = vmatpush1.bf16.msra.mxu0 0
  %942 = vmatprep.subr.bf16.mxu0 0
  %943 = vmatpush1.bf16.msra.mxu0 0
  %944 = vmatprep.subr.bf16.mxu0 0
  %945 = vmatpush1.bf16.msra.mxu0 0
  %946 = vmatprep.subr.bf16.mxu0 0
  %947 = vmatpush1.bf16.msra.mxu0 0
  %948 = vmatprep.subr.bf16.mxu0 0
  %949 = vmatpush1.bf16.msra.mxu0 0
  %950 = vmatprep.subr.bf16.mxu0 0
  %951 = vmatpush1.bf16.msra.mxu0 0
  %952 = vmatprep.subr.bf16.mxu0 0
  %953 = vmatpush1.bf16.msra.mxu0 0
  %954 = vmatprep.subr.bf16.mxu0 0
  %955 = vmatpush1.bf16.msra.mxu0 0
  %956 = vmatprep.subr.bf16.mxu0 0
  %957 = vmatpush1.bf16.msra.mxu0 0
  %958 = vmatprep.subr.bf16.mxu0 0
  %959 = vmatpush1.bf16.msra.mxu0 0
  %960 = vmatprep.subr.bf16.mxu0 0
  %961 = vmatpush1.bf16.msra.mxu0 0
  %962 = vmatprep.subr.bf16.mxu0 0
  %963 = vmatpush1.bf16.msra.mxu0 0
  %964 = vmatprep.subr.bf16.mxu0 0
  %965 = vmatpush1.bf16.msra.mxu0 0
  %966 = vmatprep.subr.bf16.mxu0 0
  %967 = vmatpush1.bf16.msra.mxu0 0
  %968 = vmatprep.mubr.bf16.mxu0 0
  %969 = vmatmul.mubr.bf16.gmra.mrb[0].mxu0 %v934
  %v970 = vpop.f32.mrb[0].mxu0
  %v971 = vadd.f32 0.0, %v970
  %v972 = vpop.f32.mrb[0].mxu0
  %v973 = vpop.f32.mrb[0].mxu0
  %v974 = vpop.f32.mrb[0].mxu0
  %975 = vdwg.mxu0
  %977 = vrot.lane.b32.xlu0 %v928, 32
  %v978 = vpop.permute.xlu0 %977
  %v980 = vsel %vm284, %v978, 0
  %982 = vmatprep.subr.bf16.mxu0 0
  %983 = vmatpush1.bf16.msra.mxu0 %v417
  %984 = vmatprep.subr.bf16.mxu0 0
  %985 = vmatpush1.bf16.msra.mxu0 %v418
  %986 = vmatprep.subr.bf16.mxu0 0
  %987 = vmatpush1.bf16.msra.mxu0 0
  %988 = vmatprep.subr.bf16.mxu0 0
  %989 = vmatpush1.bf16.msra.mxu0 0
  %990 = vmatprep.subr.bf16.mxu0 0
  %991 = vmatpush1.bf16.msra.mxu0 0
  %992 = vmatprep.subr.bf16.mxu0 0
  %993 = vmatpush1.bf16.msra.mxu0 0
  %994 = vmatprep.subr.bf16.mxu0 0
  %995 = vmatpush1.bf16.msra.mxu0 0
  %996 = vmatprep.subr.bf16.mxu0 0
  %997 = vmatpush1.bf16.msra.mxu0 0
  %998 = vmatprep.subr.bf16.mxu0 0
  %999 = vmatpush1.bf16.msra.mxu0 0
  %1000 = vmatprep.subr.bf16.mxu0 0
  %1001 = vmatpush1.bf16.msra.mxu0 0
  %1002 = vmatprep.subr.bf16.mxu0 0
  %1003 = vmatpush1.bf16.msra.mxu0 0
  %1004 = vmatprep.subr.bf16.mxu0 0
  %1005 = vmatpush1.bf16.msra.mxu0 0
  %1006 = vmatprep.subr.bf16.mxu0 0
  %1007 = vmatpush1.bf16.msra.mxu0 0
  %1008 = vmatprep.subr.bf16.mxu0 0
  %1009 = vmatpush1.bf16.msra.mxu0 0
  %1010 = vmatprep.subr.bf16.mxu0 0
  %1011 = vmatpush1.bf16.msra.mxu0 0
  %1012 = vmatprep.subr.bf16.mxu0 0
  %1013 = vmatpush1.bf16.msra.mxu0 0
  %1014 = vmatprep.mubr.bf16.mxu0 0
  %1015 = vmatmul.mubr.bf16.gmra.mrb[0].mxu0 %v980
  %v1016 = vpop.f32.mrb[0].mxu0
  %v1017 = vadd.f32 %v971, %v1016
  %v1018 = vpop.f32.mrb[0].mxu0
  %v1019 = vpop.f32.mrb[0].mxu0
  %v1020 = vpop.f32.mrb[0].mxu0
  %1021 = vdwg.mxu0
  %v1022 = vadd.f32 %v1017, %v269
  %v1023 = vxor.u32 %v1022, 2147483648
  %v1024 = vmul.f32 %v1023, 1.442695
  %v1025 = vpow.pop %v1024
  %v1026 = vadd.f32 %v1025, 1.0
  %v1027 = vrcp.pop %v1026
  %v1028 = vmul.f32 1.0, %v1027
  %v1029 = vtanh.pop %v1022
  %v1030 = vmul.f32 %v1028, %v854
  %1032 = vrot.lane.b32.xlu0 %v1029, 64
  %v1033 = vpop.permute.xlu0 %1032
  %v1035 = vmul.f32 %v1028, %v1033
  %1037 = vrot.lane.b32.xlu0 %v1035, 32
  %v1038 = vpop.permute.xlu0 %1037
  %v1040 = vadd.f32 %v1030, %v1038
  %v1041 = vtanh.pop %v1040
  %1043 = vrot.lane.b32.xlu0 %v1041, 64
  %v1044 = vpop.permute.xlu0 %1043
  %v1046 = vmul.f32 %v1028, %v1044
  %s1047 = scalar_lea.vmem [#allocation2], 32
  %v1048 = vld [vmem:[%s1047] sm:$0xff]
  %1049 = vmatprep.subr.bf16.mxu0 0
  %1050 = vmatpush1.bf16.msra.mxu0 %v280
  %1051 = vmatprep.subr.bf16.mxu0 0
  %1052 = vmatpush1.bf16.msra.mxu0 %v281
  %1053 = vmatprep.subr.bf16.mxu0 0
  %1054 = vmatpush1.bf16.msra.mxu0 0
  %1055 = vmatprep.subr.bf16.mxu0 0
  %1056 = vmatpush1.bf16.msra.mxu0 0
  %1057 = vmatprep.subr.bf16.mxu0 0
  %1058 = vmatpush1.bf16.msra.mxu0 0
  %1059 = vmatprep.subr.bf16.mxu0 0
  %1060 = vmatpush1.bf16.msra.mxu0 0
  %1061 = vmatprep.subr.bf16.mxu0 0
  %1062 = vmatpush1.bf16.msra.mxu0 0
  %1063 = vmatprep.subr.bf16.mxu0 0
  %1064 = vmatpush1.bf16.msra.mxu0 0
  %1065 = vmatprep.subr.bf16.mxu0 0
  %1066 = vmatpush1.bf16.msra.mxu0 0
  %1067 = vmatprep.subr.bf16.mxu0 0
  %1068 = vmatpush1.bf16.msra.mxu0 0
  %1069 = vmatprep.subr.bf16.mxu0 0
  %1070 = vmatpush1.bf16.msra.mxu0 0
  %1071 = vmatprep.subr.bf16.mxu0 0
  %1072 = vmatpush1.bf16.msra.mxu0 0
  %1073 = vmatprep.subr.bf16.mxu0 0
  %1074 = vmatpush1.bf16.msra.mxu0 0
  %1075 = vmatprep.subr.bf16.mxu0 0
  %1076 = vmatpush1.bf16.msra.mxu0 0
  %1077 = vmatprep.subr.bf16.mxu0 0
  %1078 = vmatpush1.bf16.msra.mxu0 0
  %1079 = vmatprep.subr.bf16.mxu0 0
  %1080 = vmatpush1.bf16.msra.mxu0 0
  %1081 = vmatprep.mubr.bf16.mxu0 0
  %1082 = vmatmul.mubr.bf16.gmra.mrb[0].mxu0 %v980
  %v1083 = vpop.f32.mrb[0].mxu0
  %v1084 = vadd.f32 0.0, %v1083
  %v1085 = vpop.f32.mrb[0].mxu0
  %v1086 = vpop.f32.mrb[0].mxu0
  %v1087 = vpop.f32.mrb[0].mxu0
  %1088 = vdwg.mxu0
  %v1089 = vadd.f32 %v1048, %v1084
  %v1090 = vxor.u32 %v1089, 2147483648
  %v1091 = vmul.f32 %v1090, 1.442695
  %v1092 = vpow.pop %v1091
  %v1093 = vadd.f32 %v1092, 1.0
  %v1094 = vrcp.pop %v1093
  %v1095 = vmul.f32 1.0, %v1094
  %v1096 = vtanh.pop %v1089
  %v1097 = vmul.f32 %v1095, %v921
  %1099 = vrot.lane.b32.xlu0 %v1096, 64
  %v1100 = vpop.permute.xlu0 %1099
  %v1102 = vmul.f32 %v1095, %v1100
  %1104 = vrot.lane.b32.xlu0 %v1102, 32
  %v1105 = vpop.permute.xlu0 %1104
  %v1107 = vadd.f32 %v1097, %v1105
  %v1108 = vtanh.pop %v1107
  %1110 = vrot.lane.b32.xlu0 %v1108, 64
  %v1111 = vpop.permute.xlu0 %1110
  %v1113 = vmul.f32 %v1095, %v1111
  %v1114 = vpack.c.bf16 %v1113, %v1113
  %v1115 = vpack.c.bf16 %v1046, %v1046
  %1117 = vrot.lane.b32.xlu0 %v1115, 32
  %v1118 = vpop.permute.xlu0 %1117
  %v1120 = vsel %vm284, %v1118, 0
  %1122 = vmatprep.subr.bf16.mxu0 0
  %1123 = vmatpush1.bf16.msra.mxu0 %v362
  %1124 = vmatprep.subr.bf16.mxu0 0
  %1125 = vmatpush1.bf16.msra.mxu0 %v363
  %1126 = vmatprep.subr.bf16.mxu0 0
  %1127 = vmatpush1.bf16.msra.mxu0 0
  %1128 = vmatprep.subr.bf16.mxu0 0
  %1129 = vmatpush1.bf16.msra.mxu0 0
  %1130 = vmatprep.subr.bf16.mxu0 0
  %1131 = vmatpush1.bf16.msra.mxu0 0
  %1132 = vmatprep.subr.bf16.mxu0 0
  %1133 = vmatpush1.bf16.msra.mxu0 0
  %1134 = vmatprep.subr.bf16.mxu0 0
  %1135 = vmatpush1.bf16.msra.mxu0 0
  %1136 = vmatprep.subr.bf16.mxu0 0
  %1137 = vmatpush1.bf16.msra.mxu0 0
  %1138 = vmatprep.subr.bf16.mxu0 0
  %1139 = vmatpush1.bf16.msra.mxu0 0
  %1140 = vmatprep.subr.bf16.mxu0 0
  %1141 = vmatpush1.bf16.msra.mxu0 0
  %1142 = vmatprep.subr.bf16.mxu0 0
  %1143 = vmatpush1.bf16.msra.mxu0 0
  %1144 = vmatprep.subr.bf16.mxu0 0
  %1145 = vmatpush1.bf16.msra.mxu0 0
  %1146 = vmatprep.subr.bf16.mxu0 0
  %1147 = vmatpush1.bf16.msra.mxu0 0
  %1148 = vmatprep.subr.bf16.mxu0 0
  %1149 = vmatpush1.bf16.msra.mxu0 0
  %1150 = vmatprep.subr.bf16.mxu0 0
  %1151 = vmatpush1.bf16.msra.mxu0 0
  %1152 = vmatprep.subr.bf16.mxu0 0
  %1153 = vmatpush1.bf16.msra.mxu0 0
  %1154 = vmatprep.mubr.bf16.mxu0 0
  %1155 = vmatmul.mubr.bf16.gmra.mrb[0].mxu0 %v1120
  %v1156 = vpop.f32.mrb[0].mxu0
  %v1157 = vadd.f32 0.0, %v1156
  %v1158 = vpop.f32.mrb[0].mxu0
  %v1159 = vpop.f32.mrb[0].mxu0
  %v1160 = vpop.f32.mrb[0].mxu0
  %1161 = vdwg.mxu0
  %1163 = vrot.lane.b32.xlu0 %v1114, 32
  %v1164 = vpop.permute.xlu0 %1163
  %v1166 = vsel %vm284, %v1164, 0
  %1168 = vmatprep.subr.bf16.mxu0 0
  %1169 = vmatpush1.bf16.msra.mxu0 %v417
  %1170 = vmatprep.subr.bf16.mxu0 0
  %1171 = vmatpush1.bf16.msra.mxu0 %v418
  %1172 = vmatprep.subr.bf16.mxu0 0
  %1173 = vmatpush1.bf16.msra.mxu0 0
  %1174 = vmatprep.subr.bf16.mxu0 0
  %1175 = vmatpush1.bf16.msra.mxu0 0
  %1176 = vmatprep.subr.bf16.mxu0 0
  %1177 = vmatpush1.bf16.msra.mxu0 0
  %1178 = vmatprep.subr.bf16.mxu0 0
  %1179 = vmatpush1.bf16.msra.mxu0 0
  %1180 = vmatprep.subr.bf16.mxu0 0
  %1181 = vmatpush1.bf16.msra.mxu0 0
  %1182 = vmatprep.subr.bf16.mxu0 0
  %1183 = vmatpush1.bf16.msra.mxu0 0
  %1184 = vmatprep.subr.bf16.mxu0 0
  %1185 = vmatpush1.bf16.msra.mxu0 0
  %1186 = vmatprep.subr.bf16.mxu0 0
  %1187 = vmatpush1.bf16.msra.mxu0 0
  %1188 = vmatprep.subr.bf16.mxu0 0
  %1189 = vmatpush1.bf16.msra.mxu0 0
  %1190 = vmatprep.subr.bf16.mxu0 0
  %1191 = vmatpush1.bf16.msra.mxu0 0
  %1192 = vmatprep.subr.bf16.mxu0 0
  %1193 = vmatpush1.bf16.msra.mxu0 0
  %1194 = vmatprep.subr.bf16.mxu0 0
  %1195 = vmatpush1.bf16.msra.mxu0 0
  %1196 = vmatprep.subr.bf16.mxu0 0
  %1197 = vmatpush1.bf16.msra.mxu0 0
  %1198 = vmatprep.subr.bf16.mxu0 0
  %1199 = vmatpush1.bf16.msra.mxu0 0
  %1200 = vmatprep.mubr.bf16.mxu0 0
  %1201 = vmatmul.mubr.bf16.gmra.mrb[0].mxu0 %v1166
  %v1202 = vpop.f32.mrb[0].mxu0
  %v1203 = vadd.f32 %v1157, %v1202
  %v1204 = vpop.f32.mrb[0].mxu0
  %v1205 = vpop.f32.mrb[0].mxu0
  %v1206 = vpop.f32.mrb[0].mxu0
  %1207 = vdwg.mxu0
  %v1208 = vadd.f32 %v1203, %v269
  %v1209 = vxor.u32 %v1208, 2147483648
  %v1210 = vmul.f32 %v1209, 1.442695
  %v1211 = vpow.pop %v1210
  %v1212 = vadd.f32 %v1211, 1.0
  %v1213 = vrcp.pop %v1212
  %v1214 = vmul.f32 1.0, %v1213
  %v1215 = vtanh.pop %v1208
  %v1216 = vmul.f32 %v1214, %v1040
  %1218 = vrot.lane.b32.xlu0 %v1215, 64
  %v1219 = vpop.permute.xlu0 %1218
  %v1221 = vmul.f32 %v1214, %v1219
  %1223 = vrot.lane.b32.xlu0 %v1221, 32
  %v1224 = vpop.permute.xlu0 %1223
  %v1226 = vadd.f32 %v1216, %v1224
  %v1227 = vtanh.pop %v1226
  %1229 = vrot.lane.b32.xlu0 %v1227, 64
  %v1230 = vpop.permute.xlu0 %1229
  %v1232 = vmul.f32 %v1214, %v1230
  %s1233 = scalar_lea.vmem [#allocation2], 40
  %v1234 = vld [vmem:[%s1233] sm:$0xff]
  %1235 = vmatprep.subr.bf16.mxu0 0
  %1236 = vmatpush1.bf16.msra.mxu0 %v280
  %1237 = vmatprep.subr.bf16.mxu0 0
  %1238 = vmatpush1.bf16.msra.mxu0 %v281
  %1239 = vmatprep.subr.bf16.mxu0 0
  %1240 = vmatpush1.bf16.msra.mxu0 0
  %1241 = vmatprep.subr.bf16.mxu0 0
  %1242 = vmatpush1.bf16.msra.mxu0 0
  %1243 = vmatprep.subr.bf16.mxu0 0
  %1244 = vmatpush1.bf16.msra.mxu0 0
  %1245 = vmatprep.subr.bf16.mxu0 0
  %1246 = vmatpush1.bf16.msra.mxu0 0
  %1247 = vmatprep.subr.bf16.mxu0 0
  %1248 = vmatpush1.bf16.msra.mxu0 0
  %1249 = vmatprep.subr.bf16.mxu0 0
  %1250 = vmatpush1.bf16.msra.mxu0 0
  %1251 = vmatprep.subr.bf16.mxu0 0
  %1252 = vmatpush1.bf16.msra.mxu0 0
  %1253 = vmatprep.subr.bf16.mxu0 0
  %1254 = vmatpush1.bf16.msra.mxu0 0
  %1255 = vmatprep.subr.bf16.mxu0 0
  %1256 = vmatpush1.bf16.msra.mxu0 0
  %1257 = vmatprep.subr.bf16.mxu0 0
  %1258 = vmatpush1.bf16.msra.mxu0 0
  %1259 = vmatprep.subr.bf16.mxu0 0
  %1260 = vmatpush1.bf16.msra.mxu0 0
  %1261 = vmatprep.subr.bf16.mxu0 0
  %1262 = vmatpush1.bf16.msra.mxu0 0
  %1263 = vmatprep.subr.bf16.mxu0 0
  %1264 = vmatpush1.bf16.msra.mxu0 0
  %1265 = vmatprep.subr.bf16.mxu0 0
  %1266 = vmatpush1.bf16.msra.mxu0 0
  %1267 = vmatprep.mubr.bf16.mxu0 0
  %1268 = vmatmul.mubr.bf16.gmra.mrb[0].mxu0 %v1166
  %v1269 = vpop.f32.mrb[0].mxu0
  %v1270 = vadd.f32 0.0, %v1269
  %v1271 = vpop.f32.mrb[0].mxu0
  %v1272 = vpop.f32.mrb[0].mxu0
  %v1273 = vpop.f32.mrb[0].mxu0
  %1274 = vdwg.mxu0
  %v1275 = vadd.f32 %v1234, %v1270
  %v1276 = vxor.u32 %v1275, 2147483648
  %v1277 = vmul.f32 %v1276, 1.442695
  %v1278 = vpow.pop %v1277
  %v1279 = vadd.f32 %v1278, 1.0
  %v1280 = vrcp.pop %v1279
  %v1281 = vmul.f32 1.0, %v1280
  %v1282 = vtanh.pop %v1275
  %v1283 = vmul.f32 %v1281, %v1107
  %1285 = vrot.lane.b32.xlu0 %v1282, 64
  %v1286 = vpop.permute.xlu0 %1285
  %v1288 = vmul.f32 %v1281, %v1286
  %1290 = vrot.lane.b32.xlu0 %v1288, 32
  %v1291 = vpop.permute.xlu0 %1290
  %v1293 = vadd.f32 %v1283, %v1291
  %v1294 = vtanh.pop %v1293
  %1296 = vrot.lane.b32.xlu0 %v1294, 64
  %v1297 = vpop.permute.xlu0 %1296
  %v1299 = vmul.f32 %v1281, %v1297
  %v1300 = vpack.c.bf16 %v1299, %v1299
  %v1301 = vpack.c.bf16 %v1232, %v1232
  %1303 = vrot.lane.b32.xlu0 %v1301, 32
  %v1304 = vpop.permute.xlu0 %1303
  %v1306 = vsel %vm284, %v1304, 0
  %1308 = vmatprep.subr.bf16.mxu0 0
  %1309 = vmatpush1.bf16.msra.mxu0 %v362
  %1310 = vmatprep.subr.bf16.mxu0 0
  %1311 = vmatpush1.bf16.msra.mxu0 %v363
  %1312 = vmatprep.subr.bf16.mxu0 0
  %1313 = vmatpush1.bf16.msra.mxu0 0
  %1314 = vmatprep.subr.bf16.mxu0 0
  %1315 = vmatpush1.bf16.msra.mxu0 0
  %1316 = vmatprep.subr.bf16.mxu0 0
  %1317 = vmatpush1.bf16.msra.mxu0 0
  %1318 = vmatprep.subr.bf16.mxu0 0
  %1319 = vmatpush1.bf16.msra.mxu0 0
  %1320 = vmatprep.subr.bf16.mxu0 0
  %1321 = vmatpush1.bf16.msra.mxu0 0
  %1322 = vmatprep.subr.bf16.mxu0 0
  %1323 = vmatpush1.bf16.msra.mxu0 0
  %1324 = vmatprep.subr.bf16.mxu0 0
  %1325 = vmatpush1.bf16.msra.mxu0 0
  %1326 = vmatprep.subr.bf16.mxu0 0
  %1327 = vmatpush1.bf16.msra.mxu0 0
  %1328 = vmatprep.subr.bf16.mxu0 0
  %1329 = vmatpush1.bf16.msra.mxu0 0
  %1330 = vmatprep.subr.bf16.mxu0 0
  %1331 = vmatpush1.bf16.msra.mxu0 0
  %1332 = vmatprep.subr.bf16.mxu0 0
  %1333 = vmatpush1.bf16.msra.mxu0 0
  %1334 = vmatprep.subr.bf16.mxu0 0
  %1335 = vmatpush1.bf16.msra.mxu0 0
  %1336 = vmatprep.subr.bf16.mxu0 0
  %1337 = vmatpush1.bf16.msra.mxu0 0
  %1338 = vmatprep.subr.bf16.mxu0 0
  %1339 = vmatpush1.bf16.msra.mxu0 0
  %1340 = vmatprep.mubr.bf16.mxu0 0
  %1341 = vmatmul.mubr.bf16.gmra.mrb[0].mxu0 %v1306
  %v1342 = vpop.f32.mrb[0].mxu0
  %v1343 = vadd.f32 0.0, %v1342
  %v1344 = vpop.f32.mrb[0].mxu0
  %v1345 = vpop.f32.mrb[0].mxu0
  %v1346 = vpop.f32.mrb[0].mxu0
  %1347 = vdwg.mxu0
  %1349 = vrot.lane.b32.xlu0 %v1300, 32
  %v1350 = vpop.permute.xlu0 %1349
  %v1352 = vsel %vm284, %v1350, 0
  %1354 = vmatprep.subr.bf16.mxu0 0
  %1355 = vmatpush1.bf16.msra.mxu0 %v417
  %1356 = vmatprep.subr.bf16.mxu0 0
  %1357 = vmatpush1.bf16.msra.mxu0 %v418
  %1358 = vmatprep.subr.bf16.mxu0 0
  %1359 = vmatpush1.bf16.msra.mxu0 0
  %1360 = vmatprep.subr.bf16.mxu0 0
  %1361 = vmatpush1.bf16.msra.mxu0 0
  %1362 = vmatprep.subr.bf16.mxu0 0
  %1363 = vmatpush1.bf16.msra.mxu0 0
  %1364 = vmatprep.subr.bf16.mxu0 0
  %1365 = vmatpush1.bf16.msra.mxu0 0
  %1366 = vmatprep.subr.bf16.mxu0 0
  %1367 = vmatpush1.bf16.msra.mxu0 0
  %1368 = vmatprep.subr.bf16.mxu0 0
  %1369 = vmatpush1.bf16.msra.mxu0 0
  %1370 = vmatprep.subr.bf16.mxu0 0
  %1371 = vmatpush1.bf16.msra.mxu0 0
  %1372 = vmatprep.subr.bf16.mxu0 0
  %1373 = vmatpush1.bf16.msra.mxu0 0
  %1374 = vmatprep.subr.bf16.mxu0 0
  %1375 = vmatpush1.bf16.msra.mxu0 0
  %1376 = vmatprep.subr.bf16.mxu0 0
  %1377 = vmatpush1.bf16.msra.mxu0 0
  %1378 = vmatprep.subr.bf16.mxu0 0
  %1379 = vmatpush1.bf16.msra.mxu0 0
  %1380 = vmatprep.subr.bf16.mxu0 0
  %1381 = vmatpush1.bf16.msra.mxu0 0
  %1382 = vmatprep.subr.bf16.mxu0 0
  %1383 = vmatpush1.bf16.msra.mxu0 0
  %1384 = vmatprep.subr.bf16.mxu0 0
  %1385 = vmatpush1.bf16.msra.mxu0 0
  %1386 = vmatprep.mubr.bf16.mxu0 0
  %1387 = vmatmul.mubr.bf16.gmra.mrb[0].mxu0 %v1352
  %v1388 = vpop.f32.mrb[0].mxu0
  %v1389 = vadd.f32 %v1343, %v1388
  %v1390 = vpop.f32.mrb[0].mxu0
  %v1391 = vpop.f32.mrb[0].mxu0
  %v1392 = vpop.f32.mrb[0].mxu0
  %1393 = vdwg.mxu0
  %v1394 = vadd.f32 %v1389, %v269
  %v1395 = vxor.u32 %v1394, 2147483648
  %v1396 = vmul.f32 %v1395, 1.442695
  %v1397 = vpow.pop %v1396
  %v1398 = vadd.f32 %v1397, 1.0
  %v1399 = vrcp.pop %v1398
  %v1400 = vmul.f32 1.0, %v1399
  %v1401 = vtanh.pop %v1394
  %v1402 = vmul.f32 %v1400, %v1226
  %1404 = vrot.lane.b32.xlu0 %v1401, 64
  %v1405 = vpop.permute.xlu0 %1404
  %v1407 = vmul.f32 %v1400, %v1405
  %1409 = vrot.lane.b32.xlu0 %v1407, 32
  %v1410 = vpop.permute.xlu0 %1409
  %v1412 = vadd.f32 %v1402, %v1410
  %v1413 = vtanh.pop %v1412
  %1415 = vrot.lane.b32.xlu0 %v1413, 64
  %v1416 = vpop.permute.xlu0 %1415
  %v1418 = vmul.f32 %v1400, %v1416
  %s1419 = scalar_lea.vmem [#allocation2], 48
  %v1420 = vld [vmem:[%s1419] sm:$0xff]
  %1421 = vmatprep.subr.bf16.mxu0 0
  %1422 = vmatpush1.bf16.msra.mxu0 %v280
  %1423 = vmatprep.subr.bf16.mxu0 0
  %1424 = vmatpush1.bf16.msra.mxu0 %v281
  %1425 = vmatprep.subr.bf16.mxu0 0
  %1426 = vmatpush1.bf16.msra.mxu0 0
  %1427 = vmatprep.subr.bf16.mxu0 0
  %1428 = vmatpush1.bf16.msra.mxu0 0
  %1429 = vmatprep.subr.bf16.mxu0 0
  %1430 = vmatpush1.bf16.msra.mxu0 0
  %1431 = vmatprep.subr.bf16.mxu0 0
  %1432 = vmatpush1.bf16.msra.mxu0 0
  %1433 = vmatprep.subr.bf16.mxu0 0
  %1434 = vmatpush1.bf16.msra.mxu0 0
  %1435 = vmatprep.subr.bf16.mxu0 0
  %1436 = vmatpush1.bf16.msra.mxu0 0
  %1437 = vmatprep.subr.bf16.mxu0 0
  %1438 = vmatpush1.bf16.msra.mxu0 0
  %1439 = vmatprep.subr.bf16.mxu0 0
  %1440 = vmatpush1.bf16.msra.mxu0 0
  %1441 = vmatprep.subr.bf16.mxu0 0
  %1442 = vmatpush1.bf16.msra.mxu0 0
  %1443 = vmatprep.subr.bf16.mxu0 0
  %1444 = vmatpush1.bf16.msra.mxu0 0
  %1445 = vmatprep.subr.bf16.mxu0 0
  %1446 = vmatpush1.bf16.msra.mxu0 0
  %1447 = vmatprep.subr.bf16.mxu0 0
  %1448 = vmatpush1.bf16.msra.mxu0 0
  %1449 = vmatprep.subr.bf16.mxu0 0
  %1450 = vmatpush1.bf16.msra.mxu0 0
  %1451 = vmatprep.subr.bf16.mxu0 0
  %1452 = vmatpush1.bf16.msra.mxu0 0
  %1453 = vmatprep.mubr.bf16.mxu0 0
  %1454 = vmatmul.mubr.bf16.gmra.mrb[0].mxu0 %v1352
  %v1455 = vpop.f32.mrb[0].mxu0
  %v1456 = vadd.f32 0.0, %v1455
  %v1457 = vpop.f32.mrb[0].mxu0
  %v1458 = vpop.f32.mrb[0].mxu0
  %v1459 = vpop.f32.mrb[0].mxu0
  %1460 = vdwg.mxu0
  %v1461 = vadd.f32 %v1420, %v1456
  %v1462 = vxor.u32 %v1461, 2147483648
  %v1463 = vmul.f32 %v1462, 1.442695
  %v1464 = vpow.pop %v1463
  %v1465 = vadd.f32 %v1464, 1.0
  %v1466 = vrcp.pop %v1465
  %v1467 = vmul.f32 1.0, %v1466
  %v1468 = vtanh.pop %v1461
  %v1469 = vmul.f32 %v1467, %v1293
  %1471 = vrot.lane.b32.xlu0 %v1468, 64
  %v1472 = vpop.permute.xlu0 %1471
  %v1474 = vmul.f32 %v1467, %v1472
  %1476 = vrot.lane.b32.xlu0 %v1474, 32
  %v1477 = vpop.permute.xlu0 %1476
  %v1479 = vadd.f32 %v1469, %v1477
  %v1480 = vtanh.pop %v1479
  %1482 = vrot.lane.b32.xlu0 %v1480, 64
  %v1483 = vpop.permute.xlu0 %1482
  %v1485 = vmul.f32 %v1467, %v1483
  %v1486 = vpack.c.bf16 %v1485, %v1485
  %v1487 = vpack.c.bf16 %v1418, %v1418
  %1489 = vrot.lane.b32.xlu0 %v1487, 32
  %v1490 = vpop.permute.xlu0 %1489
  %v1492 = vsel %vm284, %v1490, 0
  %1494 = vmatprep.subr.bf16.mxu0 0
  %1495 = vmatpush1.bf16.msra.mxu0 %v362
  %1496 = vmatprep.subr.bf16.mxu0 0
  %1497 = vmatpush1.bf16.msra.mxu0 %v363
  %1498 = vmatprep.subr.bf16.mxu0 0
  %1499 = vmatpush1.bf16.msra.mxu0 0
  %1500 = vmatprep.subr.bf16.mxu0 0
  %1501 = vmatpush1.bf16.msra.mxu0 0
  %1502 = vmatprep.subr.bf16.mxu0 0
  %1503 = vmatpush1.bf16.msra.mxu0 0
  %1504 = vmatprep.subr.bf16.mxu0 0
  %1505 = vmatpush1.bf16.msra.mxu0 0
  %1506 = vmatprep.subr.bf16.mxu0 0
  %1507 = vmatpush1.bf16.msra.mxu0 0
  %1508 = vmatprep.subr.bf16.mxu0 0
  %1509 = vmatpush1.bf16.msra.mxu0 0
  %1510 = vmatprep.subr.bf16.mxu0 0
  %1511 = vmatpush1.bf16.msra.mxu0 0
  %1512 = vmatprep.subr.bf16.mxu0 0
  %1513 = vmatpush1.bf16.msra.mxu0 0
  %1514 = vmatprep.subr.bf16.mxu0 0
  %1515 = vmatpush1.bf16.msra.mxu0 0
  %1516 = vmatprep.subr.bf16.mxu0 0
  %1517 = vmatpush1.bf16.msra.mxu0 0
  %1518 = vmatprep.subr.bf16.mxu0 0
  %1519 = vmatpush1.bf16.msra.mxu0 0
  %1520 = vmatprep.subr.bf16.mxu0 0
  %1521 = vmatpush1.bf16.msra.mxu0 0
  %1522 = vmatprep.subr.bf16.mxu0 0
  %1523 = vmatpush1.bf16.msra.mxu0 0
  %1524 = vmatprep.subr.bf16.mxu0 0
  %1525 = vmatpush1.bf16.msra.mxu0 0
  %1526 = vmatprep.mubr.bf16.mxu0 0
  %1527 = vmatmul.mubr.bf16.gmra.mrb[0].mxu0 %v1492
  %v1528 = vpop.f32.mrb[0].mxu0
  %v1529 = vadd.f32 0.0, %v1528
  %v1530 = vpop.f32.mrb[0].mxu0
  %v1531 = vpop.f32.mrb[0].mxu0
  %v1532 = vpop.f32.mrb[0].mxu0
  %1533 = vdwg.mxu0
  %1535 = vrot.lane.b32.xlu0 %v1486, 32
  %v1536 = vpop.permute.xlu0 %1535
  %v1538 = vsel %vm284, %v1536, 0
  %1540 = vmatprep.subr.bf16.mxu0 0
  %1541 = vmatpush1.bf16.msra.mxu0 %v417
  %1542 = vmatprep.subr.bf16.mxu0 0
  %1543 = vmatpush1.bf16.msra.mxu0 %v418
  %1544 = vmatprep.subr.bf16.mxu0 0
  %1545 = vmatpush1.bf16.msra.mxu0 0
  %1546 = vmatprep.subr.bf16.mxu0 0
  %1547 = vmatpush1.bf16.msra.mxu0 0
  %1548 = vmatprep.subr.bf16.mxu0 0
  %1549 = vmatpush1.bf16.msra.mxu0 0
  %1550 = vmatprep.subr.bf16.mxu0 0
  %1551 = vmatpush1.bf16.msra.mxu0 0
  %1552 = vmatprep.subr.bf16.mxu0 0
  %1553 = vmatpush1.bf16.msra.mxu0 0
  %1554 = vmatprep.subr.bf16.mxu0 0
  %1555 = vmatpush1.bf16.msra.mxu0 0
  %1556 = vmatprep.subr.bf16.mxu0 0
  %1557 = vmatpush1.bf16.msra.mxu0 0
  %1558 = vmatprep.subr.bf16.mxu0 0
  %1559 = vmatpush1.bf16.msra.mxu0 0
  %1560 = vmatprep.subr.bf16.mxu0 0
  %1561 = vmatpush1.bf16.msra.mxu0 0
  %1562 = vmatprep.subr.bf16.mxu0 0
  %1563 = vmatpush1.bf16.msra.mxu0 0
  %1564 = vmatprep.subr.bf16.mxu0 0
  %1565 = vmatpush1.bf16.msra.mxu0 0
  %1566 = vmatprep.subr.bf16.mxu0 0
  %1567 = vmatpush1.bf16.msra.mxu0 0
  %1568 = vmatprep.subr.bf16.mxu0 0
  %1569 = vmatpush1.bf16.msra.mxu0 0
  %1570 = vmatprep.subr.bf16.mxu0 0
  %1571 = vmatpush1.bf16.msra.mxu0 0
  %1572 = vmatprep.mubr.bf16.mxu0 0
  %1573 = vmatmul.mubr.bf16.gmra.mrb[0].mxu0 %v1538
  %v1574 = vpop.f32.mrb[0].mxu0
  %v1575 = vadd.f32 %v1529, %v1574
  %v1576 = vpop.f32.mrb[0].mxu0
  %v1577 = vpop.f32.mrb[0].mxu0
  %v1578 = vpop.f32.mrb[0].mxu0
  %1579 = vdwg.mxu0
  %v1580 = vadd.f32 %v1575, %v269
  %v1581 = vxor.u32 %v1580, 2147483648
  %v1582 = vmul.f32 %v1581, 1.442695
  %v1583 = vpow.pop %v1582
  %v1584 = vadd.f32 %v1583, 1.0
  %v1585 = vrcp.pop %v1584
  %v1586 = vmul.f32 1.0, %v1585
  %v1587 = vtanh.pop %v1580
  %v1588 = vmul.f32 %v1586, %v1412
  %1590 = vrot.lane.b32.xlu0 %v1587, 64
  %v1591 = vpop.permute.xlu0 %1590
  %v1593 = vmul.f32 %v1586, %v1591
  %1595 = vrot.lane.b32.xlu0 %v1593, 32
  %v1596 = vpop.permute.xlu0 %1595
  %v1598 = vadd.f32 %v1588, %v1596
  %v1599 = vtanh.pop %v1598
  %1601 = vrot.lane.b32.xlu0 %v1599, 64
  %v1602 = vpop.permute.xlu0 %1601
  %v1604 = vmul.f32 %v1586, %v1602
  %s1605 = scalar_lea.vmem [#allocation2], 56
  %v1606 = vld [vmem:[%s1605] sm:$0xff]
  %1607 = vmatprep.subr.bf16.mxu0 0
  %1608 = vmatpush1.bf16.msra.mxu0 %v280
  %1609 = vmatprep.subr.bf16.mxu0 0
  %1610 = vmatpush1.bf16.msra.mxu0 %v281
  %1611 = vmatprep.subr.bf16.mxu0 0
  %1612 = vmatpush1.bf16.msra.mxu0 0
  %1613 = vmatprep.subr.bf16.mxu0 0
  %1614 = vmatpush1.bf16.msra.mxu0 0
  %1615 = vmatprep.subr.bf16.mxu0 0
  %1616 = vmatpush1.bf16.msra.mxu0 0
  %1617 = vmatprep.subr.bf16.mxu0 0
  %1618 = vmatpush1.bf16.msra.mxu0 0
  %1619 = vmatprep.subr.bf16.mxu0 0
  %1620 = vmatpush1.bf16.msra.mxu0 0
  %1621 = vmatprep.subr.bf16.mxu0 0
  %1622 = vmatpush1.bf16.msra.mxu0 0
  %1623 = vmatprep.subr.bf16.mxu0 0
  %1624 = vmatpush1.bf16.msra.mxu0 0
  %1625 = vmatprep.subr.bf16.mxu0 0
  %1626 = vmatpush1.bf16.msra.mxu0 0
  %1627 = vmatprep.subr.bf16.mxu0 0
  %1628 = vmatpush1.bf16.msra.mxu0 0
  %1629 = vmatprep.subr.bf16.mxu0 0
  %1630 = vmatpush1.bf16.msra.mxu0 0
  %1631 = vmatprep.subr.bf16.mxu0 0
  %1632 = vmatpush1.bf16.msra.mxu0 0
  %1633 = vmatprep.subr.bf16.mxu0 0
  %1634 = vmatpush1.bf16.msra.mxu0 0
  %1635 = vmatprep.subr.bf16.mxu0 0
  %1636 = vmatpush1.bf16.msra.mxu0 0
  %1637 = vmatprep.subr.bf16.mxu0 0
  %1638 = vmatpush1.bf16.msra.mxu0 0
  %1639 = vmatprep.mubr.bf16.mxu0 0
  %1640 = vmatmul.mubr.bf16.gmra.mrb[0].mxu0 %v1538
  %v1641 = vpop.f32.mrb[0].mxu0
  %v1642 = vadd.f32 0.0, %v1641
  %v1643 = vpop.f32.mrb[0].mxu0
  %v1644 = vpop.f32.mrb[0].mxu0
  %v1645 = vpop.f32.mrb[0].mxu0
  %1646 = vdwg.mxu0
  %v1647 = vadd.f32 %v1606, %v1642
  %v1648 = vxor.u32 %v1647, 2147483648
  %v1649 = vmul.f32 %v1648, 1.442695
  %v1650 = vpow.pop %v1649
  %v1651 = vadd.f32 %v1650, 1.0
  %v1652 = vrcp.pop %v1651
  %v1653 = vmul.f32 1.0, %v1652
  %v1654 = vtanh.pop %v1647
  %v1655 = vmul.f32 %v1653, %v1479
  %1657 = vrot.lane.b32.xlu0 %v1654, 64
  %v1658 = vpop.permute.xlu0 %1657
  %v1660 = vmul.f32 %v1653, %v1658
  %1662 = vrot.lane.b32.xlu0 %v1660, 32
  %v1663 = vpop.permute.xlu0 %1662
  %v1665 = vadd.f32 %v1655, %v1663
  %v1666 = vtanh.pop %v1665
  %1668 = vrot.lane.b32.xlu0 %v1666, 64
  %v1669 = vpop.permute.xlu0 %1668
  %v1671 = vmul.f32 %v1653, %v1669
  %v1672 = vpack.c.bf16 %v1671, %v1671
  %v1673 = vpack.c.bf16 %v1604, %v1604
  %1675 = vrot.lane.b32.xlu0 %v1673, 32
  %v1676 = vpop.permute.xlu0 %1675
  %v1678 = vsel %vm284, %v1676, 0
  %1680 = vmatprep.subr.bf16.mxu0 0
  %1681 = vmatpush1.bf16.msra.mxu0 %v362
  %1682 = vmatprep.subr.bf16.mxu0 0
  %1683 = vmatpush1.bf16.msra.mxu0 %v363
  %1684 = vmatprep.subr.bf16.mxu0 0
  %1685 = vmatpush1.bf16.msra.mxu0 0
  %1686 = vmatprep.subr.bf16.mxu0 0
  %1687 = vmatpush1.bf16.msra.mxu0 0
  %1688 = vmatprep.subr.bf16.mxu0 0
  %1689 = vmatpush1.bf16.msra.mxu0 0
  %1690 = vmatprep.subr.bf16.mxu0 0
  %1691 = vmatpush1.bf16.msra.mxu0 0
  %1692 = vmatprep.subr.bf16.mxu0 0
  %1693 = vmatpush1.bf16.msra.mxu0 0
  %1694 = vmatprep.subr.bf16.mxu0 0
  %1695 = vmatpush1.bf16.msra.mxu0 0
  %1696 = vmatprep.subr.bf16.mxu0 0
  %1697 = vmatpush1.bf16.msra.mxu0 0
  %1698 = vmatprep.subr.bf16.mxu0 0
  %1699 = vmatpush1.bf16.msra.mxu0 0
  %1700 = vmatprep.subr.bf16.mxu0 0
  %1701 = vmatpush1.bf16.msra.mxu0 0
  %1702 = vmatprep.subr.bf16.mxu0 0
  %1703 = vmatpush1.bf16.msra.mxu0 0
  %1704 = vmatprep.subr.bf16.mxu0 0
  %1705 = vmatpush1.bf16.msra.mxu0 0
  %1706 = vmatprep.subr.bf16.mxu0 0
  %1707 = vmatpush1.bf16.msra.mxu0 0
  %1708 = vmatprep.subr.bf16.mxu0 0
  %1709 = vmatpush1.bf16.msra.mxu0 0
  %1710 = vmatprep.subr.bf16.mxu0 0
  %1711 = vmatpush1.bf16.msra.mxu0 0
  %1712 = vmatprep.mubr.bf16.mxu0 0
  %1713 = vmatmul.mubr.bf16.gmra.mrb[0].mxu0 %v1678
  %v1714 = vpop.f32.mrb[0].mxu0
  %v1715 = vadd.f32 0.0, %v1714
  %v1716 = vpop.f32.mrb[0].mxu0
  %v1717 = vpop.f32.mrb[0].mxu0
  %v1718 = vpop.f32.mrb[0].mxu0
  %1719 = vdwg.mxu0
  %1721 = vrot.lane.b32.xlu0 %v1672, 32
  %v1722 = vpop.permute.xlu0 %1721
  %v1724 = vsel %vm284, %v1722, 0
  %1726 = vmatprep.subr.bf16.mxu0 0
  %1727 = vmatpush1.bf16.msra.mxu0 %v417
  %1728 = vmatprep.subr.bf16.mxu0 0
  %1729 = vmatpush1.bf16.msra.mxu0 %v418
  %1730 = vmatprep.subr.bf16.mxu0 0
  %1731 = vmatpush1.bf16.msra.mxu0 0
  %1732 = vmatprep.subr.bf16.mxu0 0
  %1733 = vmatpush1.bf16.msra.mxu0 0
  %1734 = vmatprep.subr.bf16.mxu0 0
  %1735 = vmatpush1.bf16.msra.mxu0 0
  %1736 = vmatprep.subr.bf16.mxu0 0
  %1737 = vmatpush1.bf16.msra.mxu0 0
  %1738 = vmatprep.subr.bf16.mxu0 0
  %1739 = vmatpush1.bf16.msra.mxu0 0
  %1740 = vmatprep.subr.bf16.mxu0 0
  %1741 = vmatpush1.bf16.msra.mxu0 0
  %1742 = vmatprep.subr.bf16.mxu0 0
  %1743 = vmatpush1.bf16.msra.mxu0 0
  %1744 = vmatprep.subr.bf16.mxu0 0
  %1745 = vmatpush1.bf16.msra.mxu0 0
  %1746 = vmatprep.subr.bf16.mxu0 0
  %1747 = vmatpush1.bf16.msra.mxu0 0
  %1748 = vmatprep.subr.bf16.mxu0 0
  %1749 = vmatpush1.bf16.msra.mxu0 0
  %1750 = vmatprep.subr.bf16.mxu0 0
  %1751 = vmatpush1.bf16.msra.mxu0 0
  %1752 = vmatprep.subr.bf16.mxu0 0
  %1753 = vmatpush1.bf16.msra.mxu0 0
  %1754 = vmatprep.subr.bf16.mxu0 0
  %1755 = vmatpush1.bf16.msra.mxu0 0
  %1756 = vmatprep.subr.bf16.mxu0 0
  %1757 = vmatpush1.bf16.msra.mxu0 0
  %1758 = vmatprep.mubr.bf16.mxu0 0
  %1759 = vmatmul.mubr.bf16.gmra.mrb[0].mxu0 %v1724
  %v1760 = vpop.f32.mrb[0].mxu0
  %v1761 = vadd.f32 %v1715, %v1760
  %v1762 = vpop.f32.mrb[0].mxu0
  %v1763 = vpop.f32.mrb[0].mxu0
  %v1764 = vpop.f32.mrb[0].mxu0
  %1765 = vdwg.mxu0
  %v1766 = vadd.f32 %v1761, %v269
  %v1767 = vxor.u32 %v1766, 2147483648
  %v1768 = vmul.f32 %v1767, 1.442695
  %v1769 = vpow.pop %v1768
  %v1770 = vadd.f32 %v1769, 1.0
  %v1771 = vrcp.pop %v1770
  %v1772 = vmul.f32 1.0, %v1771
  %v1773 = vtanh.pop %v1766
  %v1774 = vmul.f32 %v1772, %v1598
  %1776 = vrot.lane.b32.xlu0 %v1773, 64
  %v1777 = vpop.permute.xlu0 %1776
  %v1779 = vmul.f32 %v1772, %v1777
  %1781 = vrot.lane.b32.xlu0 %v1779, 32
  %v1782 = vpop.permute.xlu0 %1781
  %v1784 = vadd.f32 %v1774, %v1782
  %v1785 = vtanh.pop %v1784
  %1787 = vrot.lane.b32.xlu0 %v1785, 64
  %v1788 = vpop.permute.xlu0 %1787
  %v1790 = vmul.f32 %v1772, %v1788
  %1792 = vrot.lane.b32.xlu0 %v1671, 32
  %v1793 = vpop.permute.xlu0 %1792
  %1795 = vst.msk [vmem:[%s10] sm:$0xff] %vm284, %v1793
  %1797 = vrot.lane.b32.xlu0 %v1665, 96
  %v1798 = vpop.permute.xlu0 %1797
  %1800 = vst.msk [vmem:[%s11] sm:$0xff] %vm284, %v1798
  %1802 = vrot.lane.b32.xlu0 %v1790, 32
  %v1803 = vpop.permute.xlu0 %1802
  %s1805 = scalar_lea.vmem %s10, 8
  %1806 = vst.msk [vmem:[%s1805] sm:$0xff] %vm284, %v1803
  %1808 = vrot.lane.b32.xlu0 %v1784, 96
  %v1809 = vpop.permute.xlu0 %1808
  %s1811 = scalar_lea.vmem %s11, 8
  %1812 = vst.msk [vmem:[%s1811] sm:$0xff] %vm284, %v1809
  %v1813 = vld [vmem:[%s7] sm:$0xff]
  %v1814 = vld [vmem:[%s7 + $0x8] sm:$0xff]
  %v1815 = vld [vmem:[%s7 + $0x10] sm:$0xff]
  %v1816 = vld [vmem:[%s7 + $0x18] sm:$0xff]
  %v1817 = vld [vmem:[#allocation3] sm:$0x1]
  %v1819 = vlaneseq
  %v1820 = vshrl.u32 %v1819, 7
  %v1821 = vsub.s32 0, %v1820
  %v1822 = vrot.slane %v1817, %v1821
  %v1824 = vsel %vm284, %v1803, 0
  %1826 = vmatprep.subr.mxu0 0.0
  %1827 = vmatpush1.msra.mxu0 %v1813
  %1828 = vmatprep.subr.mxu0 0.0
  %1829 = vmatpush1.msra.mxu0 %v1814
  %1830 = vmatprep.subr.mxu0 0.0
  %1831 = vmatpush1.msra.mxu0 %v1815
  %1832 = vmatprep.subr.mxu0 0.0
  %1833 = vmatpush1.msra.mxu0 %v1816
  %1834 = vmatprep.subr.mxu0 0.0
  %1835 = vmatpush1.msra.mxu0 0.0
  %1836 = vmatprep.subr.mxu0 0.0
  %1837 = vmatpush1.msra.mxu0 0.0
  %1838 = vmatprep.subr.mxu0 0.0
  %1839 = vmatpush1.msra.mxu0 0.0
  %1840 = vmatprep.subr.mxu0 0.0
  %1841 = vmatpush1.msra.mxu0 0.0
  %1842 = vmatprep.subr.mxu0 0.0
  %1843 = vmatpush1.msra.mxu0 0.0
  %1844 = vmatprep.subr.mxu0 0.0
  %1845 = vmatpush1.msra.mxu0 0.0
  %1846 = vmatprep.subr.mxu0 0.0
  %1847 = vmatpush1.msra.mxu0 0.0
  %1848 = vmatprep.subr.mxu0 0.0
  %1849 = vmatpush1.msra.mxu0 0.0
  %1850 = vmatprep.subr.mxu0 0.0
  %1851 = vmatpush1.msra.mxu0 0.0
  %1852 = vmatprep.subr.mxu0 0.0
  %1853 = vmatpush1.msra.mxu0 0.0
  %1854 = vmatprep.subr.mxu0 0.0
  %1855 = vmatpush1.msra.mxu0 0.0
  %1856 = vmatprep.subr.mxu0 0.0
  %1857 = vmatpush1.msra.mxu0 0.0
  %1858 = vmatprep.subr.mxu0 0.0
  %1859 = vmatpush1.msra.mxu0 0.0
  %1860 = vmatprep.subr.mxu0 0.0
  %1861 = vmatpush1.msra.mxu0 0.0
  %1862 = vmatprep.subr.mxu0 0.0
  %1863 = vmatpush1.msra.mxu0 0.0
  %1864 = vmatprep.subr.mxu0 0.0
  %1865 = vmatpush1.msra.mxu0 0.0
  %1866 = vmatprep.subr.mxu0 0.0
  %1867 = vmatpush1.msra.mxu0 0.0
  %1868 = vmatprep.subr.mxu0 0.0
  %1869 = vmatpush1.msra.mxu0 0.0
  %1870 = vmatprep.subr.mxu0 0.0
  %1871 = vmatpush1.msra.mxu0 0.0
  %1872 = vmatprep.subr.mxu0 0.0
  %1873 = vmatpush1.msra.mxu0 0.0
  %1874 = vmatprep.subr.mxu0 0.0
  %1875 = vmatpush1.msra.mxu0 0.0
  %1876 = vmatprep.subr.mxu0 0.0
  %1877 = vmatpush1.msra.mxu0 0.0
  %1878 = vmatprep.subr.mxu0 0.0
  %1879 = vmatpush1.msra.mxu0 0.0
  %1880 = vmatprep.subr.mxu0 0.0
  %1881 = vmatpush1.msra.mxu0 0.0
  %1882 = vmatprep.subr.mxu0 0.0
  %1883 = vmatpush1.msra.mxu0 0.0
  %1884 = vmatprep.subr.mxu0 0.0
  %1885 = vmatpush1.msra.mxu0 0.0
  %1886 = vmatprep.subr.mxu0 0.0
  %1887 = vmatpush1.msra.mxu0 0.0
  %1888 = vmatprep.subr.mxu0 0.0
  %1889 = vmatpush1.msra.mxu0 0.0
  %1890 = vmatprep.mubr.f32.mxu0 0.0
  %1891 = vmatmul.mubr.f32.gmra.mrb[0].mxu0 %v1824
  %v1892 = vpop.f32.mrb[0].mxu0
  %v1893 = vadd.f32 %v1822, %v1892
  %v1894 = vpop.f32.mrb[0].mxu0
  %1895 = vdwg.mxu0
  %v1896 = vxor.u32 %v1893, 2147483648
  %v1897 = vmul.f32 %v1896, 1.442695
  %v1898 = vpow.pop %v1897
  %v1899 = vadd.f32 %v1898, 1.0
  %v1900 = vrcp.pop %v1899
  %v1901 = vmul.f32 1.0, %v1900
  %vm1902 = vcmask 7168
  %1903 = vst.msk [vmem:[%s9] sm:$0xff] %vm1902, %v1901
  // Predicated region
  $region38: #{sentiment_rnn_forward.1} parent=0 // pred_check
    _
  $region39: #{sentiment_rnn_forward.1} parent=0 // pred_check_branch
    %1905 = sbr.rel (0) target = $region41
  $region40: #{sentiment_rnn_forward.1} parent=0 // pred_region
    _
  $region41: #{sentiment_rnn_forward.1} parent=0 // pred_fallthru
    _
  // Predicated region
  $region42: #{sentiment_rnn_forward.1} parent=0 // pred_check
    _
  $region43: #{sentiment_rnn_forward.1} parent=0 // pred_check_branch
    %1907 = sbr.rel (0) target = $region45
  $region44: #{sentiment_rnn_forward.1} parent=0 // pred_region
    _
  $region45: #{sentiment_rnn_forward.1} parent=0 // pred_fallthru
    _
  // Predicated region
  $region46: #{sentiment_rnn_forward.1} parent=0 // pred_check
    _
  $region47: #{sentiment_rnn_forward.1} parent=0 // pred_check_branch
    %1909 = sbr.rel (0) target = $region49
  $region48: #{sentiment_rnn_forward.1} parent=0 // pred_region
    _
  $region49: #{sentiment_rnn_forward.1} parent=0 // pred_fallthru
    _
  // Predicated region
  $region50: #{sentiment_rnn_forward.1} parent=0 // pred_check
    _
  $region51: #{sentiment_rnn_forward.1} parent=0 // pred_check_branch
    %1911 = sbr.rel (0) target = $region53
  $region52: #{sentiment_rnn_forward.1} parent=0 // pred_region
    _
  $region53: #{sentiment_rnn_forward.1} parent=0 // pred_fallthru
    _
  // Predicated region
  $region54: #{sentiment_rnn_forward.1} parent=0 // pred_check
    _
  $region55: #{sentiment_rnn_forward.1} parent=0 // pred_check_branch
    %1913 = sbr.rel (0) target = $region57
  $region56: #{sentiment_rnn_forward.1} parent=0 // pred_region
    _
  $region57: #{sentiment_rnn_forward.1} parent=0 // pred_fallthru
    _
  // Predicated region
  $region58: #{sentiment_rnn_forward.1} parent=0 // pred_check
    _
  $region59: #{sentiment_rnn_forward.1} parent=0 // pred_check_branch
    %1915 = sbr.rel (0) target = $region61
  $region60: #{sentiment_rnn_forward.1} parent=0 // pred_region
    _
  $region61: #{sentiment_rnn_forward.1} parent=0 // pred_fallthru
    _

</llo_original>
